<compile_context>
chip_gen: v7x
topology: tpu7x:2x2x1
jax: 0.10.0
libtpu: 0.0.40
codegen_flags: <defaults>
</compile_context>

<pallas_src>
import jax
import jax.numpy as jnp
from jax import lax
from jax.experimental import pallas as pl
from jax.experimental.pallas import tpu as pltpu


# -----------------------------------------------------------------------------
# Pallas kernel: one AGCRN layer, full T recurrence per grid step (grid=(B,)).
# -----------------------------------------------------------------------------
def _agcrn_layer_kernel(x_ref, h0_ref, sup_ref, pxa_ref, pgh_ref, puh_ref,
                        er2_ref, er1_ref, bg_ref, bu_ref, out_ref):
    f32 = jnp.float32
    wdt = sup_ref.dtype                      # matmul-operand dtype (bf16 or f32)

    T = x_ref.shape[0]
    N = sup_ref.shape[1]
    K = sup_ref.shape[0] // N
    H = bu_ref.shape[-1]
    D = er1_ref.shape[-1] // H
    d2h = D * 2 * H                          # gate columns in the fused x-pool

    # Constants: loaded once per grid step, captured by the fori_loop closure,
    # resident for the whole sequence.
    sup = sup_ref[...]                       # (K*N, N)      stacked supports
    pxa = pxa_ref[...]                       # (K, c_in, D*3H) gate+upd x-pools
    pgh = pgh_ref[...]                       # (K, H, D*2H)  gate h-pool
    puh = puh_ref[...]                       # (K, H, D*H)   update h-pool
    er2 = er2_ref[...]                       # (N, D*2H)     lane-repeated emb
    er1 = er1_ref[...]                       # (N, D*H)      lane-repeated emb
    bg = bg_ref[...]                         # (N, 2H)       gate bias (per node)
    bu = bu_ref[...]                         # (N, H)        update bias (per node)

    def chunk_sum(prod, out_w):
        # out[n, o] = sum_d prod[n, d*out_w + o]
        acc = prod[:, :out_w]
        for d in range(1, D):                # static unroll (D small)
            acc = acc + prod[:, d * out_w:(d + 1) * out_w]
        return acc

    def step(t, h):
        x = x_ref[t].astype(wdt)             # (N, c_in)
        hb = h.astype(wdt)                   # (N, H)

        # Batched Chebyshev-support matmuls (one MXU dot covers all K orders).
        sgx = jnp.dot(sup, x, preferred_element_type=f32).astype(wdt)   # (K*N, c_in)
        sgh = jnp.dot(sup, hb, preferred_element_type=f32).astype(wdt)  # (K*N, H)

        # Pool matmuls.  x-part is shared between gate and candidate paths.
        m_x = None                           # (N, D*3H)
        m_gh = None                          # (N, D*2H)
        for k in range(K):                   # static unroll (K small)
            lo, hi = k * N, (k + 1) * N
            cx = jnp.dot(sgx[lo:hi], pxa[k], preferred_element_type=f32)
            ch = jnp.dot(sgh[lo:hi], pgh[k], preferred_element_type=f32)
            m_x = cx if m_x is None else m_x + cx
            m_gh = ch if m_gh is None else m_gh + ch

        m_gate = m_x[:, :d2h] + m_gh         # (N, D*2H)   gate pre-contraction
        m_xu = m_x[:, d2h:]                  # (N, D*H)    candidate x-part

        # z_r = sigmoid(gconv([x, h]))   (concat removed via linearity)
        zr = jax.nn.sigmoid(bg + chunk_sum(er2 * m_gate, 2 * H))
        z = zr[:, :H]
        r = zr[:, H:]

        # hc = tanh(gconv([x, r*h])) — reuses the shared x contribution.
        sgr = jnp.dot(sup, (r * h).astype(wdt),
                      preferred_element_type=f32).astype(wdt)            # (K*N, H)
        m_u = m_xu
        for k in range(K):
            lo, hi = k * N, (k + 1) * N
            m_u = m_u + jnp.dot(sgr[lo:hi], puh[k], preferred_element_type=f32)
        hc = jnp.tanh(bu + chunk_sum(er1 * m_u, H))

        h_new = z * h + (1.0 - z) * hc       # all gate math in f32
        out_ref[t] = h_new
        return h_new

    lax.fori_loop(0, T, step, h0_ref[...])


def agcrn_layer_forward(x_seq, h0, sup_flat, px_all, pgh, puh, er2, er1, bg, bu):
    """One AGCRN layer over the whole sequence.

    x_seq: (B, T, N, c_in), h0: (B, N, H) -> (B, T, N, H)
    """
    B, T, N, c_in = x_seq.shape
    H = h0.shape[-1]
    K = px_all.shape[0]
    D = er1.shape[-1] // H

    operands = (x_seq, h0, sup_flat, px_all, pgh, puh, er2, er1, bg, bu)
    out_bytes = B * T * N * H * 4
    bytes_accessed = out_bytes + sum(
        int(a.size) * int(a.dtype.itemsize) for a in operands)
    cost = pl.CostEstimate(
        flops=int(2 * B * T * K * N * (N * (c_in + 2 * H)
                                       + 3 * D * H * (c_in + H))),
        transcendentals=int(B * T * N * 3 * H),
        bytes_accessed=int(bytes_accessed))

    const2 = lambda b: (0, 0)
    const3 = lambda b: (0, 0, 0)

    return pl.pallas_call(
        _agcrn_layer_kernel,
        out_shape=jax.ShapeDtypeStruct((B, T, N, H), jnp.float32),
        grid_spec=pltpu.PrefetchScalarGridSpec(
            num_scalar_prefetch=0,
            grid=(B,),
            in_specs=[
                pl.BlockSpec((None, T, N, c_in), lambda b: (b, 0, 0, 0)),  # x slab
                pl.BlockSpec((None, N, H), lambda b: (b, 0, 0)),           # init state
                pl.BlockSpec(sup_flat.shape, const2),                      # supports
                pl.BlockSpec(px_all.shape, const3),                        # fused x pools
                pl.BlockSpec(pgh.shape, const3),                           # gate h pool
                pl.BlockSpec(puh.shape, const3),                           # update h pool
                pl.BlockSpec(er2.shape, const2),                           # emb rep (2H)
                pl.BlockSpec(er1.shape, const2),                           # emb rep (H)
                pl.BlockSpec(bg.shape, const2),                            # gate bias
                pl.BlockSpec(bu.shape, const2),                            # update bias
            ],
            out_specs=pl.BlockSpec((None, T, N, H), lambda b: (b, 0, 0, 0)),
        ),
        compiler_params=pltpu.CompilerParams(
            dimension_semantics=("parallel",)),
        cost_estimate=cost,
    )(*operands)


# -----------------------------------------------------------------------------
# Glue (plain JAX): supports, pool re-layout, per-node biases, layer loop.
# -----------------------------------------------------------------------------
def compute_supports(node_embedding, cheb_k):
    N = node_embedding.shape[0]
    support = jax.nn.softmax(
        jax.nn.relu(node_embedding @ node_embedding.T), axis=1)
    s_set = [jnp.eye(N, dtype=node_embedding.dtype), support]
    for _ in range(2, cheb_k):
        s_set.append(2.0 * support @ s_set[-1] - s_set[-2])
    return jnp.stack(s_set, axis=0)  # (K, N, N)


def _split_pool(pool, c_in):
    """pool: (D, K, C, O) -> x-part (K, c_in, D*O), h-part (K, C-c_in, D*O).

    Flattened lane axis ordered as (d, o): col = d*O + o.
    """
    D, K, C, O = pool.shape
    px = jnp.transpose(pool[:, :, :c_in, :], (1, 2, 0, 3)).reshape(K, c_in, D * O)
    ph = jnp.transpose(pool[:, :, c_in:, :], (1, 2, 0, 3)).reshape(K, C - c_in, D * O)
    return px, ph


def avwdcrnn_forward(x, init_state, node_embedding, layer_params, cheb_k,
                     param_dtype=jnp.bfloat16):
    """
    x:              (B, T, N, in_dim)
    init_state:     (L, B, N, H)
    node_embedding: (N, D)
    returns (current_inputs (B,T,N,H), output_hidden (L,B,N,H))
    """
    supports = compute_supports(node_embedding, cheb_k)        # (K, N, N)
    K, N, _ = supports.shape
    sup_flat = supports.reshape(K * N, N).astype(param_dtype)

    current = x
    output_hidden = []
    for i, p in enumerate(layer_params):
        c_in = current.shape[-1]
        H = p['upd_w'].shape[-1]

        pgx, pgh = _split_pool(p['gate_w'], c_in)              # (K,c_in,D*2H),(K,H,D*2H)
        pux, puh = _split_pool(p['upd_w'], c_in)               # (K,c_in,D*H), (K,H,D*H)
        # Fuse gate-x and update-x pools along the output columns.
        px_all = jnp.concatenate([pgx, pux], axis=-1).astype(param_dtype)
        pgh = pgh.astype(param_dtype)
        puh = puh.astype(param_dtype)

        bg = node_embedding @ p['gate_b']                      # (N, 2H) f32
        bu = node_embedding @ p['upd_b']                       # (N, H)  f32
        er2 = jnp.repeat(node_embedding, 2 * H, axis=1)        # (N, D*2H) f32
        er1 = jnp.repeat(node_embedding, H, axis=1)            # (N, D*H)  f32

        out_seq = agcrn_layer_forward(current, init_state[i], sup_flat, px_all,
                                      pgh, puh, er2, er1, bg, bu)  # (B,T,N,H)
        output_hidden.append(out_seq[:, -1])
        current = out_seq
    return current, jnp.stack(output_hidden, axis=0)


# -----------------------------------------------------------------------------
# Pure-JAX reference (mirrors the PyTorch einsums) for correctness checks.
# -----------------------------------------------------------------------------
def _ref_avwgcn(x, node_embedding, weights_pool, bias_pool, cheb_k):
    supports = compute_supports(node_embedding, cheb_k)
    weights = jnp.einsum('nd,dkio->nkio', node_embedding, weights_pool)
    bias = node_embedding @ bias_pool
    x_g = jnp.einsum('knm,bmc->bknc', supports, x)
    x_g = jnp.transpose(x_g, (0, 2, 1, 3))
    return jnp.einsum('bnki,nkio->bno', x_g, weights) + bias


def _ref_cell(x_t, state, node_embedding, p, cheb_k, hidden):
    cat = jnp.concatenate([x_t, state], axis=-1)
    z_r = jax.nn.sigmoid(
        _ref_avwgcn(cat, node_embedding, p['gate_w'], p['gate_b'], cheb_k))
    z, r = z_r[..., :hidden], z_r[..., hidden:]
    cand = jnp.concatenate([x_t, r * state], axis=-1)
    hc = jnp.tanh(
        _ref_avwgcn(cand, node_embedding, p['upd_w'], p['upd_b'], cheb_k))
    return z * state + (1.0 - z) * hc


def _ref_forward(x, init_state, node_embedding, layer_params, cheb_k, hidden):
    current = x
    output_hidden = []
    for i, p in enumerate(layer_params):
        state = init_state[i]
        inner = []
        for t in range(x.shape[1]):
            state = _ref_cell(current[:, t], state, node_embedding, p,
                              cheb_k, hidden)
            inner.append(state)
        output_hidden.append(state)
        current = jnp.stack(inner, axis=1)
    return current, jnp.stack(output_hidden, axis=0)


# -----------------------------------------------------------------------------
if __name__ == "__main__":
    # Small shapes consistent with AVWDCRNN(num_node, in_dim, out_dim, cheb_k,
    # embed_dim, num_layers).
    B, T = 2, 8
    num_node = 16
    in_dim = 2
    hidden = 32       # out_dim
    cheb_k = 3
    embed_dim = 8
    num_layers = 2

    key = jax.random.PRNGKey(0)
    keys = jax.random.split(key, 3 + 4 * num_layers)

    x = jax.random.normal(keys[0], (B, T, num_node, in_dim), jnp.float32)
    node_embedding = 0.5 * jax.random.normal(
        keys[1], (num_node, embed_dim), jnp.float32)
    init_state = 0.1 * jax.random.normal(
        keys[2], (num_layers, B, num_node, hidden), jnp.float32)

    layer_params = []
    for i in range(num_layers):
        layer_in = in_dim if i == 0 else hidden
        c = layer_in + hidden
        k0 = 3 + 4 * i
        layer_params.append({
            'gate_w': 0.1 * jax.random.normal(
                keys[k0 + 0], (embed_dim, cheb_k, c, 2 * hidden), jnp.float32),
            'gate_b': 0.1 * jax.random.normal(
                keys[k0 + 1], (embed_dim, 2 * hidden), jnp.float32),
            'upd_w': 0.1 * jax.random.normal(
                keys[k0 + 2], (embed_dim, cheb_k, c, hidden), jnp.float32),
            'upd_b': 0.1 * jax.random.normal(
                keys[k0 + 3], (embed_dim, hidden), jnp.float32),
        })

    ref_seq, ref_hidden = _ref_forward(
        x, init_state, node_embedding, layer_params, cheb_k, hidden)

    # 1) f32 weights: tight algorithmic check of the kernel.
    seq32, hid32 = avwdcrnn_forward(
        x, init_state, node_embedding, layer_params, cheb_k,
        param_dtype=jnp.float32)
    jax.block_until_ready(seq32)
    jax.block_until_ready(hid32)
    assert seq32.shape == (B, T, num_node, hidden)
    assert hid32.shape == (num_layers, B, num_node, hidden)
    assert jnp.allclose(seq32, ref_seq, rtol=1e-2, atol=1e-2)
    assert jnp.allclose(hid32, ref_hidden, rtol=1e-2, atol=1e-2)

    # 2) bf16 weights / matmul operands (f32 accumulation): looser tolerance
    #    to absorb bf16 rounding accumulated through the two-layer recurrence.
    seq16, hid16 = avwdcrnn_forward(
        x, init_state, node_embedding, layer_params, cheb_k,
        param_dtype=jnp.bfloat16)
    jax.block_until_ready(seq16)
    jax.block_until_ready(hid16)
    assert jnp.allclose(seq16, ref_seq, rtol=5e-2, atol=5e-2)
    assert jnp.allclose(hid16, ref_hidden, rtol=5e-2, atol=5e-2)

    print("KERNEL_OK")
</pallas_src>

<mosaic_0001>
module attributes {stable_mosaic.version = 11 : i64} {
  func.func @_agcrn_layer_kernel(%arg0: i32, %arg1: memref<1x8x16x2xf32, #tpu.memory_space<vmem>>, %arg2: memref<1x16x32xf32, #tpu.memory_space<vmem>>, %arg3: memref<48x16xf32, #tpu.memory_space<vmem>>, %arg4: memref<3x2x768xf32, #tpu.memory_space<vmem>>, %arg5: memref<3x32x512xf32, #tpu.memory_space<vmem>>, %arg6: memref<3x32x256xf32, #tpu.memory_space<vmem>>, %arg7: memref<16x512xf32, #tpu.memory_space<vmem>>, %arg8: memref<16x256xf32, #tpu.memory_space<vmem>>, %arg9: memref<16x64xf32, #tpu.memory_space<vmem>>, %arg10: memref<16x32xf32, #tpu.memory_space<vmem>>, %arg11: memref<1x8x16x32xf32, #tpu.memory_space<vmem>>) attributes {dimension_semantics = [#tpu.dimension_semantics<parallel>], iteration_bounds = array<i64: 2>, scalar_prefetch = 0 : i64, scratch_operands = 0 : i64, tpu.core_type = #tpu.core_type<tc>, window_params = [{transform_indices = @transform_0, window_bounds = array<i64: 1, 8, 16, 2>}, {transform_indices = @transform_1, window_bounds = array<i64: 1, 16, 32>}, {pipeline_mode = #tpu.pipeline_mode<synchronous>, transform_indices = @transform_2, window_bounds = array<i64: 48, 16>}, {pipeline_mode = #tpu.pipeline_mode<synchronous>, transform_indices = @transform_3, window_bounds = array<i64: 3, 2, 768>}, {pipeline_mode = #tpu.pipeline_mode<synchronous>, transform_indices = @transform_4, window_bounds = array<i64: 3, 32, 512>}, {pipeline_mode = #tpu.pipeline_mode<synchronous>, transform_indices = @transform_5, window_bounds = array<i64: 3, 32, 256>}, {pipeline_mode = #tpu.pipeline_mode<synchronous>, transform_indices = @transform_6, window_bounds = array<i64: 16, 512>}, {pipeline_mode = #tpu.pipeline_mode<synchronous>, transform_indices = @transform_7, window_bounds = array<i64: 16, 256>}, {pipeline_mode = #tpu.pipeline_mode<synchronous>, transform_indices = @transform_8, window_bounds = array<i64: 16, 64>}, {pipeline_mode = #tpu.pipeline_mode<synchronous>, transform_indices = @transform_9, window_bounds = array<i64: 16, 32>}, {transform_indices = @transform_10, window_bounds = array<i64: 1, 8, 16, 32>}]} {
    %c0 = arith.constant 0 : index
    %c0_0 = arith.constant 0 : index
    %0 = vector.load %arg3[%c0, %c0_0] : memref<48x16xf32, #tpu.memory_space<vmem>>, vector<48x16xf32>
    %c0_1 = arith.constant 0 : index
    %c0_2 = arith.constant 0 : index
    %c0_3 = arith.constant 0 : index
    %1 = vector.load %arg4[%c0_1, %c0_2, %c0_3] : memref<3x2x768xf32, #tpu.memory_space<vmem>>, vector<3x2x768xf32>
    %c0_4 = arith.constant 0 : index
    %c0_5 = arith.constant 0 : index
    %c0_6 = arith.constant 0 : index
    %2 = vector.load %arg5[%c0_4, %c0_5, %c0_6] : memref<3x32x512xf32, #tpu.memory_space<vmem>>, vector<3x32x512xf32>
    %c0_7 = arith.constant 0 : index
    %c0_8 = arith.constant 0 : index
    %c0_9 = arith.constant 0 : index
    %3 = vector.load %arg6[%c0_7, %c0_8, %c0_9] : memref<3x32x256xf32, #tpu.memory_space<vmem>>, vector<3x32x256xf32>
    %c0_10 = arith.constant 0 : index
    %c0_11 = arith.constant 0 : index
    %4 = vector.load %arg7[%c0_10, %c0_11] : memref<16x512xf32, #tpu.memory_space<vmem>>, vector<16x512xf32>
    %c0_12 = arith.constant 0 : index
    %c0_13 = arith.constant 0 : index
    %5 = vector.load %arg8[%c0_12, %c0_13] : memref<16x256xf32, #tpu.memory_space<vmem>>, vector<16x256xf32>
    %c0_14 = arith.constant 0 : index
    %c0_15 = arith.constant 0 : index
    %6 = vector.load %arg9[%c0_14, %c0_15] : memref<16x64xf32, #tpu.memory_space<vmem>>, vector<16x64xf32>
    %c0_16 = arith.constant 0 : index
    %c0_17 = arith.constant 0 : index
    %7 = vector.load %arg10[%c0_16, %c0_17] : memref<16x32xf32, #tpu.memory_space<vmem>>, vector<16x32xf32>
    %c0_18 = arith.constant 0 : index
    %c0_19 = arith.constant 0 : index
    %c0_20 = arith.constant 0 : index
    %8 = vector.load %arg2[%c0_18, %c0_19, %c0_20] : memref<1x16x32xf32, #tpu.memory_space<vmem>>, vector<1x16x32xf32>
    %9 = vector.shape_cast %8 : vector<1x16x32xf32> to vector<16x32xf32>
    %c0_i32 = arith.constant 0 : i32
    %c8_i32 = arith.constant 8 : i32
    %10 = arith.addi %c0_i32, %c8_i32 : i32
    %c1_i32 = arith.constant 1 : i32
    %11 = scf.for %arg12 = %c0_i32 to %10 step %c1_i32 iter_args(%arg13 = %9) -> (vector<16x32xf32>)  : i32 {
      %c0_22 = arith.constant 0 : index
      %12 = arith.index_cast %arg12 : i32 to index
      %c0_23 = arith.constant 0 : index
      %c0_24 = arith.constant 0 : index
      %13 = vector.load %arg1[%c0_22, %12, %c0_23, %c0_24] : memref<1x8x16x2xf32, #tpu.memory_space<vmem>>, vector<1x1x16x2xf32>
      %14 = vector.shape_cast %13 : vector<1x1x16x2xf32> to vector<16x2xf32>
      %cst = arith.constant dense<0.000000e+00> : vector<48x2xf32>
      %15 = tpu.matmul %0, %14, %cst {dimension_numbers = #tpu.dot_dimension_numbers<[1], [0], [0], [1], [0, 0, 1, 1], [], []>} : vector<48x16xf32>, vector<16x2xf32>, vector<48x2xf32> -> vector<48x2xf32>
      %cst_25 = arith.constant dense<0.000000e+00> : vector<48x32xf32>
      %16 = tpu.matmul %0, %arg13, %cst_25 {dimension_numbers = #tpu.dot_dimension_numbers<[1], [0], [0], [1], [0, 0, 1, 1], [], []>} : vector<48x16xf32>, vector<16x32xf32>, vector<48x32xf32> -> vector<48x32xf32>
      %17 = vector.extract_strided_slice %15 {offsets = [0, 0], sizes = [16, 2], strides = [1, 1]} : vector<48x2xf32> to vector<16x2xf32>
      %18 = vector.extract_strided_slice %1 {offsets = [0, 0, 0], sizes = [1, 2, 768], strides = [1, 1, 1]} : vector<3x2x768xf32> to vector<1x2x768xf32>
      %19 = vector.shape_cast %18 : vector<1x2x768xf32> to vector<2x768xf32>
      %cst_26 = arith.constant dense<0.000000e+00> : vector<16x768xf32>
      %20 = tpu.matmul %17, %19, %cst_26 {dimension_numbers = #tpu.dot_dimension_numbers<[1], [0], [0], [1], [0, 0, 1, 1], [], []>} : vector<16x2xf32>, vector<2x768xf32>, vector<16x768xf32> -> vector<16x768xf32>
      %21 = vector.extract_strided_slice %16 {offsets = [0, 0], sizes = [16, 32], strides = [1, 1]} : vector<48x32xf32> to vector<16x32xf32>
      %22 = vector.extract_strided_slice %2 {offsets = [0, 0, 0], sizes = [1, 32, 512], strides = [1, 1, 1]} : vector<3x32x512xf32> to vector<1x32x512xf32>
      %23 = vector.shape_cast %22 : vector<1x32x512xf32> to vector<32x512xf32>
      %cst_27 = arith.constant dense<0.000000e+00> : vector<16x512xf32>
      %24 = tpu.matmul %21, %23, %cst_27 {dimension_numbers = #tpu.dot_dimension_numbers<[1], [0], [0], [1], [0, 0, 1, 1], [], []>} : vector<16x32xf32>, vector<32x512xf32>, vector<16x512xf32> -> vector<16x512xf32>
      %25 = vector.extract_strided_slice %15 {offsets = [16, 0], sizes = [16, 2], strides = [1, 1]} : vector<48x2xf32> to vector<16x2xf32>
      %26 = vector.extract_strided_slice %1 {offsets = [1, 0, 0], sizes = [1, 2, 768], strides = [1, 1, 1]} : vector<3x2x768xf32> to vector<1x2x768xf32>
      %27 = vector.shape_cast %26 : vector<1x2x768xf32> to vector<2x768xf32>
      %cst_28 = arith.constant dense<0.000000e+00> : vector<16x768xf32>
      %28 = tpu.matmul %25, %27, %cst_28 {dimension_numbers = #tpu.dot_dimension_numbers<[1], [0], [0], [1], [0, 0, 1, 1], [], []>} : vector<16x2xf32>, vector<2x768xf32>, vector<16x768xf32> -> vector<16x768xf32>
      %29 = vector.extract_strided_slice %16 {offsets = [16, 0], sizes = [16, 32], strides = [1, 1]} : vector<48x32xf32> to vector<16x32xf32>
      %30 = vector.extract_strided_slice %2 {offsets = [1, 0, 0], sizes = [1, 32, 512], strides = [1, 1, 1]} : vector<3x32x512xf32> to vector<1x32x512xf32>
      %31 = vector.shape_cast %30 : vector<1x32x512xf32> to vector<32x512xf32>
      %cst_29 = arith.constant dense<0.000000e+00> : vector<16x512xf32>
      %32 = tpu.matmul %29, %31, %cst_29 {dimension_numbers = #tpu.dot_dimension_numbers<[1], [0], [0], [1], [0, 0, 1, 1], [], []>} : vector<16x32xf32>, vector<32x512xf32>, vector<16x512xf32> -> vector<16x512xf32>
      %33 = arith.addf %20, %28 : vector<16x768xf32>
      %34 = arith.addf %24, %32 : vector<16x512xf32>
      %35 = vector.extract_strided_slice %15 {offsets = [32, 0], sizes = [16, 2], strides = [1, 1]} : vector<48x2xf32> to vector<16x2xf32>
      %36 = vector.extract_strided_slice %1 {offsets = [2, 0, 0], sizes = [1, 2, 768], strides = [1, 1, 1]} : vector<3x2x768xf32> to vector<1x2x768xf32>
      %37 = vector.shape_cast %36 : vector<1x2x768xf32> to vector<2x768xf32>
      %cst_30 = arith.constant dense<0.000000e+00> : vector<16x768xf32>
      %38 = tpu.matmul %35, %37, %cst_30 {dimension_numbers = #tpu.dot_dimension_numbers<[1], [0], [0], [1], [0, 0, 1, 1], [], []>} : vector<16x2xf32>, vector<2x768xf32>, vector<16x768xf32> -> vector<16x768xf32>
      %39 = vector.extract_strided_slice %16 {offsets = [32, 0], sizes = [16, 32], strides = [1, 1]} : vector<48x32xf32> to vector<16x32xf32>
      %40 = vector.extract_strided_slice %2 {offsets = [2, 0, 0], sizes = [1, 32, 512], strides = [1, 1, 1]} : vector<3x32x512xf32> to vector<1x32x512xf32>
      %41 = vector.shape_cast %40 : vector<1x32x512xf32> to vector<32x512xf32>
      %cst_31 = arith.constant dense<0.000000e+00> : vector<16x512xf32>
      %42 = tpu.matmul %39, %41, %cst_31 {dimension_numbers = #tpu.dot_dimension_numbers<[1], [0], [0], [1], [0, 0, 1, 1], [], []>} : vector<16x32xf32>, vector<32x512xf32>, vector<16x512xf32> -> vector<16x512xf32>
      %43 = arith.addf %33, %38 : vector<16x768xf32>
      %44 = arith.addf %34, %42 : vector<16x512xf32>
      %45 = vector.extract_strided_slice %43 {offsets = [0, 0], sizes = [16, 512], strides = [1, 1]} : vector<16x768xf32> to vector<16x512xf32>
      %46 = arith.addf %45, %44 : vector<16x512xf32>
      %47 = vector.extract_strided_slice %43 {offsets = [0, 512], sizes = [16, 256], strides = [1, 1]} : vector<16x768xf32> to vector<16x256xf32>
      %48 = arith.mulf %4, %46 : vector<16x512xf32>
      %49 = vector.extract_strided_slice %48 {offsets = [0, 0], sizes = [16, 64], strides = [1, 1]} : vector<16x512xf32> to vector<16x64xf32>
      %50 = vector.extract_strided_slice %48 {offsets = [0, 64], sizes = [16, 64], strides = [1, 1]} : vector<16x512xf32> to vector<16x64xf32>
      %51 = arith.addf %49, %50 : vector<16x64xf32>
      %52 = vector.extract_strided_slice %48 {offsets = [0, 128], sizes = [16, 64], strides = [1, 1]} : vector<16x512xf32> to vector<16x64xf32>
      %53 = arith.addf %51, %52 : vector<16x64xf32>
      %54 = vector.extract_strided_slice %48 {offsets = [0, 192], sizes = [16, 64], strides = [1, 1]} : vector<16x512xf32> to vector<16x64xf32>
      %55 = arith.addf %53, %54 : vector<16x64xf32>
      %56 = vector.extract_strided_slice %48 {offsets = [0, 256], sizes = [16, 64], strides = [1, 1]} : vector<16x512xf32> to vector<16x64xf32>
      %57 = arith.addf %55, %56 : vector<16x64xf32>
      %58 = vector.extract_strided_slice %48 {offsets = [0, 320], sizes = [16, 64], strides = [1, 1]} : vector<16x512xf32> to vector<16x64xf32>
      %59 = arith.addf %57, %58 : vector<16x64xf32>
      %60 = vector.extract_strided_slice %48 {offsets = [0, 384], sizes = [16, 64], strides = [1, 1]} : vector<16x512xf32> to vector<16x64xf32>
      %61 = arith.addf %59, %60 : vector<16x64xf32>
      %62 = vector.extract_strided_slice %48 {offsets = [0, 448], sizes = [16, 64], strides = [1, 1]} : vector<16x512xf32> to vector<16x64xf32>
      %63 = arith.addf %61, %62 : vector<16x64xf32>
      %64 = arith.addf %6, %63 : vector<16x64xf32>
      %65 = arith.negf %64 : vector<16x64xf32>
      %66 = math.exp %65 : vector<16x64xf32>
      %cst_32 = arith.constant 1.000000e+00 : f32
      %67 = vector.broadcast %cst_32 : f32 to vector<16x64xf32>
      %68 = arith.addf %67, %66 : vector<16x64xf32>
      %69 = arith.divf %67, %68 : vector<16x64xf32>
      %70 = vector.extract_strided_slice %69 {offsets = [0, 0], sizes = [16, 32], strides = [1, 1]} : vector<16x64xf32> to vector<16x32xf32>
      %71 = vector.extract_strided_slice %69 {offsets = [0, 32], sizes = [16, 32], strides = [1, 1]} : vector<16x64xf32> to vector<16x32xf32>
      %72 = arith.mulf %71, %arg13 : vector<16x32xf32>
      %cst_33 = arith.constant dense<0.000000e+00> : vector<48x32xf32>
      %73 = tpu.matmul %0, %72, %cst_33 {dimension_numbers = #tpu.dot_dimension_numbers<[1], [0], [0], [1], [0, 0, 1, 1], [], []>} : vector<48x16xf32>, vector<16x32xf32>, vector<48x32xf32> -> vector<48x32xf32>
      %74 = vector.extract_strided_slice %73 {offsets = [0, 0], sizes = [16, 32], strides = [1, 1]} : vector<48x32xf32> to vector<16x32xf32>
      %75 = vector.extract_strided_slice %3 {offsets = [0, 0, 0], sizes = [1, 32, 256], strides = [1, 1, 1]} : vector<3x32x256xf32> to vector<1x32x256xf32>
      %76 = vector.shape_cast %75 : vector<1x32x256xf32> to vector<32x256xf32>
      %cst_34 = arith.constant dense<0.000000e+00> : vector<16x256xf32>
      %77 = tpu.matmul %74, %76, %cst_34 {dimension_numbers = #tpu.dot_dimension_numbers<[1], [0], [0], [1], [0, 0, 1, 1], [], []>} : vector<16x32xf32>, vector<32x256xf32>, vector<16x256xf32> -> vector<16x256xf32>
      %78 = arith.addf %47, %77 : vector<16x256xf32>
      %79 = vector.extract_strided_slice %73 {offsets = [16, 0], sizes = [16, 32], strides = [1, 1]} : vector<48x32xf32> to vector<16x32xf32>
      %80 = vector.extract_strided_slice %3 {offsets = [1, 0, 0], sizes = [1, 32, 256], strides = [1, 1, 1]} : vector<3x32x256xf32> to vector<1x32x256xf32>
      %81 = vector.shape_cast %80 : vector<1x32x256xf32> to vector<32x256xf32>
      %cst_35 = arith.constant dense<0.000000e+00> : vector<16x256xf32>
      %82 = tpu.matmul %79, %81, %cst_35 {dimension_numbers = #tpu.dot_dimension_numbers<[1], [0], [0], [1], [0, 0, 1, 1], [], []>} : vector<16x32xf32>, vector<32x256xf32>, vector<16x256xf32> -> vector<16x256xf32>
      %83 = arith.addf %78, %82 : vector<16x256xf32>
      %84 = vector.extract_strided_slice %73 {offsets = [32, 0], sizes = [16, 32], strides = [1, 1]} : vector<48x32xf32> to vector<16x32xf32>
      %85 = vector.extract_strided_slice %3 {offsets = [2, 0, 0], sizes = [1, 32, 256], strides = [1, 1, 1]} : vector<3x32x256xf32> to vector<1x32x256xf32>
      %86 = vector.shape_cast %85 : vector<1x32x256xf32> to vector<32x256xf32>
      %cst_36 = arith.constant dense<0.000000e+00> : vector<16x256xf32>
      %87 = tpu.matmul %84, %86, %cst_36 {dimension_numbers = #tpu.dot_dimension_numbers<[1], [0], [0], [1], [0, 0, 1, 1], [], []>} : vector<16x32xf32>, vector<32x256xf32>, vector<16x256xf32> -> vector<16x256xf32>
      %88 = arith.addf %83, %87 : vector<16x256xf32>
      %89 = arith.mulf %5, %88 : vector<16x256xf32>
      %90 = vector.extract_strided_slice %89 {offsets = [0, 0], sizes = [16, 32], strides = [1, 1]} : vector<16x256xf32> to vector<16x32xf32>
      %91 = vector.extract_strided_slice %89 {offsets = [0, 32], sizes = [16, 32], strides = [1, 1]} : vector<16x256xf32> to vector<16x32xf32>
      %92 = arith.addf %90, %91 : vector<16x32xf32>
      %93 = vector.extract_strided_slice %89 {offsets = [0, 64], sizes = [16, 32], strides = [1, 1]} : vector<16x256xf32> to vector<16x32xf32>
      %94 = arith.addf %92, %93 : vector<16x32xf32>
      %95 = vector.extract_strided_slice %89 {offsets = [0, 96], sizes = [16, 32], strides = [1, 1]} : vector<16x256xf32> to vector<16x32xf32>
      %96 = arith.addf %94, %95 : vector<16x32xf32>
      %97 = vector.extract_strided_slice %89 {offsets = [0, 128], sizes = [16, 32], strides = [1, 1]} : vector<16x256xf32> to vector<16x32xf32>
      %98 = arith.addf %96, %97 : vector<16x32xf32>
      %99 = vector.extract_strided_slice %89 {offsets = [0, 160], sizes = [16, 32], strides = [1, 1]} : vector<16x256xf32> to vector<16x32xf32>
      %100 = arith.addf %98, %99 : vector<16x32xf32>
      %101 = vector.extract_strided_slice %89 {offsets = [0, 192], sizes = [16, 32], strides = [1, 1]} : vector<16x256xf32> to vector<16x32xf32>
      %102 = arith.addf %100, %101 : vector<16x32xf32>
      %103 = vector.extract_strided_slice %89 {offsets = [0, 224], sizes = [16, 32], strides = [1, 1]} : vector<16x256xf32> to vector<16x32xf32>
      %104 = arith.addf %102, %103 : vector<16x32xf32>
      %105 = arith.addf %7, %104 : vector<16x32xf32>
      %106 = math.tanh %105 : vector<16x32xf32>
      %107 = arith.mulf %70, %arg13 : vector<16x32xf32>
      %cst_37 = arith.constant 1.000000e+00 : f32
      %108 = vector.broadcast %cst_37 : f32 to vector<16x32xf32>
      %109 = arith.subf %108, %70 : vector<16x32xf32>
      %110 = arith.mulf %109, %106 : vector<16x32xf32>
      %111 = arith.addf %107, %110 : vector<16x32xf32>
      %c0_38 = arith.constant 0 : index
      %112 = arith.index_cast %arg12 : i32 to index
      %c0_39 = arith.constant 0 : index
      %c0_40 = arith.constant 0 : index
      %113 = vector.load %arg11[%c0_38, %112, %c0_39, %c0_40] : memref<1x8x16x32xf32, #tpu.memory_space<vmem>>, vector<1x1x16x32xf32>
      %114 = vector.shape_cast %113 : vector<1x1x16x32xf32> to vector<16x32xf32>
      %115 = vector.shape_cast %111 : vector<16x32xf32> to vector<1x1x16x32xf32>
      tpu.vector_store %arg11[%c0_38, %112, %c0_39, %c0_40], %115 {strides = array<i32>} : memref<1x8x16x32xf32, #tpu.memory_space<vmem>>, vector<1x1x16x32xf32>,
      scf.yield %111 : vector<16x32xf32>
    }
    %c8_i32_21 = arith.constant 8 : i32
    return
  }
  func.func @transform_0(%arg0: i32) -> (i32, i32, i32, i32) {
    %c0_i32 = arith.constant 0 : i32
    %c0_i32_0 = arith.constant 0 : i32
    %c0_i32_1 = arith.constant 0 : i32
    %c0_i32_2 = arith.constant 0 : i32
    return %arg0, %c0_i32, %c0_i32_0, %c0_i32_1 : i32, i32, i32, i32
  }
  func.func @transform_1(%arg0: i32) -> (i32, i32, i32) {
    %c0_i32 = arith.constant 0 : i32
    %c0_i32_0 = arith.constant 0 : i32
    %c0_i32_1 = arith.constant 0 : i32
    return %arg0, %c0_i32, %c0_i32_0 : i32, i32, i32
  }
  func.func @transform_2(%arg0: i32) -> (i32, i32) {
    %c0_i32 = arith.constant 0 : i32
    %c0_i32_0 = arith.constant 0 : i32
    %c0_i32_1 = arith.constant 0 : i32
    return %c0_i32, %c0_i32_0 : i32, i32
  }
  func.func @transform_3(%arg0: i32) -> (i32, i32, i32) {
    %c0_i32 = arith.constant 0 : i32
    %c0_i32_0 = arith.constant 0 : i32
    %c0_i32_1 = arith.constant 0 : i32
    %c0_i32_2 = arith.constant 0 : i32
    return %c0_i32, %c0_i32_0, %c0_i32_1 : i32, i32, i32
  }
  func.func @transform_4(%arg0: i32) -> (i32, i32, i32) {
    %c0_i32 = arith.constant 0 : i32
    %c0_i32_0 = arith.constant 0 : i32
    %c0_i32_1 = arith.constant 0 : i32
    %c0_i32_2 = arith.constant 0 : i32
    return %c0_i32, %c0_i32_0, %c0_i32_1 : i32, i32, i32
  }
  func.func @transform_5(%arg0: i32) -> (i32, i32, i32) {
    %c0_i32 = arith.constant 0 : i32
    %c0_i32_0 = arith.constant 0 : i32
    %c0_i32_1 = arith.constant 0 : i32
    %c0_i32_2 = arith.constant 0 : i32
    return %c0_i32, %c0_i32_0, %c0_i32_1 : i32, i32, i32
  }
  func.func @transform_6(%arg0: i32) -> (i32, i32) {
    %c0_i32 = arith.constant 0 : i32
    %c0_i32_0 = arith.constant 0 : i32
    %c0_i32_1 = arith.constant 0 : i32
    return %c0_i32, %c0_i32_0 : i32, i32
  }
  func.func @transform_7(%arg0: i32) -> (i32, i32) {
    %c0_i32 = arith.constant 0 : i32
    %c0_i32_0 = arith.constant 0 : i32
    %c0_i32_1 = arith.constant 0 : i32
    return %c0_i32, %c0_i32_0 : i32, i32
  }
  func.func @transform_8(%arg0: i32) -> (i32, i32) {
    %c0_i32 = arith.constant 0 : i32
    %c0_i32_0 = arith.constant 0 : i32
    %c0_i32_1 = arith.constant 0 : i32
    return %c0_i32, %c0_i32_0 : i32, i32
  }
  func.func @transform_9(%arg0: i32) -> (i32, i32) {
    %c0_i32 = arith.constant 0 : i32
    %c0_i32_0 = arith.constant 0 : i32
    %c0_i32_1 = arith.constant 0 : i32
    return %c0_i32, %c0_i32_0 : i32, i32
  }
  func.func @transform_10(%arg0: i32) -> (i32, i32, i32, i32) {
    %c0_i32 = arith.constant 0 : i32
    %c0_i32_0 = arith.constant 0 : i32
    %c0_i32_1 = arith.constant 0 : i32
    %c0_i32_2 = arith.constant 0 : i32
    return %arg0, %c0_i32, %c0_i32_0, %c0_i32_1 : i32, i32, i32, i32
  }
}

</mosaic_0001>

<llo_original>
// kernel: tpu_custom_call.1
$region0: #{tpu_custom_call.1}
  #allocation0 [shape = 'u32[]', space=smem, size = 0x4, offset = 0x4, fixed_abs, tag = 'smem constant byte address 0x4 - core index']
  #allocation1 [shape = 'u32[144,128]{1,0:T(1,128)}', space=vmem, size = 0x12000, scoped, tag = 'internal scratch']
  %s0 = inlined_call_operand.vmem [shape: f32[2,8,16,2], index: 0, kind: input, shape index: {}]
  %s1 = inlined_call_operand.vmem [shape: f32[2,16,32], index: 1, kind: input, shape index: {}]
  %s2 = inlined_call_operand.vmem [shape: f32[48,16], index: 2, kind: input, shape index: {}]
  %s3 = inlined_call_operand.vmem [shape: f32[3,2,768], index: 3, kind: input, shape index: {}]
  %s4 = inlined_call_operand.hbm [shape: f32[3,32,512], index: 4, kind: input, shape index: {}]
  %s5 = inlined_call_operand.vmem [shape: f32[3,32,256], index: 5, kind: input, shape index: {}]
  %s6 = inlined_call_operand.vmem [shape: f32[16,512], index: 6, kind: input, shape index: {}]
  %s7 = inlined_call_operand.vmem [shape: f32[16,256], index: 7, kind: input, shape index: {}]
  %s8 = inlined_call_operand.vmem [shape: f32[16,64], index: 8, kind: input, shape index: {}]
  %s9 = inlined_call_operand.hbm [shape: f32[16,32], index: 9, kind: input, shape index: {}]
  %s10 = inlined_call_operand.hbm [shape: f32[2,8,16,32], index: 10, kind: output, shape index: {}]
  %s11 = sld [smem:[#allocation0]]
  $region88: #{tpu_custom_call.1} parent=0
    _
  %s13 = ssub.s32 1, %s11
  %s14 = scalar_select 0, %s13, %s11
  $region1: #{tpu_custom_call.1} parent=0
    #allocation2 [shape = 'u8[196608]{0}', space=vmem, size = 0x30000, scoped, tag = 'input window, operand 4, single buffered']
    #allocation3 [shape = 's32[2]{0}', space=sflag, size = 0x8, scoped, tag = 'scoped memory for tpu_custom_call.1']
    #allocation4 [shape = 's32[2]{0}', space=sflag, size = 0x8, scoped, tag = 'scoped memory for tpu_custom_call.1']
    #allocation5 [shape = 'u8[8192]{0}', space=vmem, size = 0x2000, scoped, tag = 'input window, operand 9, single buffered']
    #allocation6 [shape = 's32[1]{0}', space=sflag, size = 0x4, scoped, tag = 'scoped memory for tpu_custom_call.1']
    #allocation7 [shape = 'u8[131072]{0}', space=vmem, size = 0x20000, scoped, tag = 'output window, operand 0']
    %15 = vsyncpa [#allocation3], 0
    %16 = vsyncpa [#allocation6], 0
    %17 = vsyncpa [#allocation4], 0
    %s18 = scalar_lea.sflag [#allocation4], 1
    %19 = vsyncpa %s18, 0
    loop: start=0, step=1, limit=4
    $region2: #{tpu_custom_call.1} parent=1 // loop_pre_header
      _
    $region3: #{tpu_custom_call.1} parent=1 // loop_header
      %s21 = sphi 0, %s25
      %p22 = scmp.ge.s32.totalorder %s21, 4
      %s31 = sphi 0, %s33
      %s34 = sphi 0, %s31
      %s35 = sphi 0, %s34
      %s51 = sphi 0, %s35
      %s57 = sphi 0, %s59
      %s60 = sphi 0, %s57
      %s61 = sphi 0, %s60
      %s77 = sphi 0, %s61
      %s81 = sphi 0, %s81
      %s83 = sphi 0, %s81
      %s84 = sphi 0, %s83
      %s98 = sphi 0, %s84
      %s102 = sphi 0, %s102
      %s104 = sphi 0, %s102
      %s105 = sphi 0, %s104
      %s119 = sphi 0, %s105
      %s123 = sphi 0, %s123
      %s125 = sphi 0, %s123
      %s126 = sphi 0, %s125
      %s140 = sphi 0, %s126
      %s144 = sphi 0, %s144
      %s146 = sphi 0, %s144
      %s147 = sphi 0, %s146
      %s161 = sphi 0, %s147
      %s165 = sphi 0, %s165
      %s167 = sphi 0, %s165
      %s168 = sphi 0, %s167
      %s182 = sphi 0, %s168
      %s186 = sphi 0, %s186
      %s188 = sphi 0, %s186
      %s189 = sphi 0, %s188
      %s203 = sphi 0, %s189
      %s207 = sphi 0, %s207
      %s209 = sphi 0, %s207
      %s210 = sphi 0, %s209
      %s224 = sphi 0, %s210
      %s228 = sphi 0, %s228
      %s230 = sphi 0, %s228
      %s231 = sphi 0, %s230
      %s245 = sphi 0, %s231
      %s251 = sphi 0, %s253
      %s254 = sphi 0, %s251
      %s255 = sphi 0, %s254
      %s271 = sphi 0, %s255
    $region4: #{tpu_custom_call.1} parent=1 // loop_header_branch
      %24 = sbr.rel (%p22) target = $region8
    $region5: #{tpu_custom_call.1} parent=1 // loop_body
      %s26 = ssub.s32 %s21, 1
      %s27 = ssub.s32 %s21, 2
      %s28 = sadd.s32 %s21, 1
      %s29 = ssub.s32 %s21, %s28
      %p30 = scmp.eq.s32.totalorder %s29, 0
      %s32 = sadd.s32 %s31, 1
      %s33 = scalar_select %p30, %s31, %s32
      %p36 = pneg %p30
      %p37 = scmp.eq.s32.totalorder %s21, 1
      %p38 = por %p36, %p37
      %p39 = scmp.ne.s32.totalorder %s31, %s34
      %p40 = scmp.eq.s32.totalorder %s21, 0
      %p41 = por %p39, %p40
      %p42 = scmp.ne.s32.totalorder %s31, %s34
      %p43 = scmp.eq.s32.totalorder %s26, 1
      %p44 = por %p42, %p43
      %p45 = scmp.ne.s32.totalorder %s34, %s35
      %p46 = scmp.eq.s32.totalorder %s26, 0
      %p47 = por %p45, %p46
      %p48 = scmp.ne.s32.totalorder %s34, %s35
      %p49 = scmp.eq.s32.totalorder %s27, 1
      %p50 = por %p48, %p49
      %p52 = scmp.ne.s32.totalorder %s35, %s51
      %p53 = scmp.eq.s32.totalorder %s27, 0
      %p54 = por %p52, %p53
      %s55 = ssub.s32 %s21, %s28
      %p56 = scmp.eq.s32.totalorder %s55, 0
      %s58 = sadd.s32 %s57, 1
      %s59 = scalar_select %p56, %s57, %s58
      %p62 = pneg %p56
      %p63 = scmp.eq.s32.totalorder %s21, 1
      %p64 = por %p62, %p63
      %p65 = scmp.ne.s32.totalorder %s57, %s60
      %p66 = scmp.eq.s32.totalorder %s21, 0
      %p67 = por %p65, %p66
      %p68 = scmp.ne.s32.totalorder %s57, %s60
      %p69 = scmp.eq.s32.totalorder %s26, 1
      %p70 = por %p68, %p69
      %p71 = scmp.ne.s32.totalorder %s60, %s61
      %p72 = scmp.eq.s32.totalorder %s26, 0
      %p73 = por %p71, %p72
      %p74 = scmp.ne.s32.totalorder %s60, %s61
      %p75 = scmp.eq.s32.totalorder %s27, 1
      %p76 = por %p74, %p75
      %p78 = scmp.ne.s32.totalorder %s61, %s77
      %p79 = scmp.eq.s32.totalorder %s27, 0
      %p80 = por %p78, %p79
      %s82 = sadd.s32 %s81, 1
      %p85 = scmp.eq.s32.totalorder %s21, 1
      %p86 = scmp.ne.s32.totalorder %s81, %s83
      %p87 = scmp.eq.s32.totalorder %s21, 0
      %p88 = por %p86, %p87
      %p89 = scmp.ne.s32.totalorder %s81, %s83
      %p90 = scmp.eq.s32.totalorder %s26, 1
      %p91 = por %p89, %p90
      %p92 = scmp.ne.s32.totalorder %s83, %s84
      %p93 = scmp.eq.s32.totalorder %s26, 0
      %p94 = por %p92, %p93
      %p95 = scmp.ne.s32.totalorder %s83, %s84
      %p96 = scmp.eq.s32.totalorder %s27, 1
      %p97 = por %p95, %p96
      %p99 = scmp.ne.s32.totalorder %s84, %s98
      %p100 = scmp.eq.s32.totalorder %s27, 0
      %p101 = por %p99, %p100
      %s103 = sadd.s32 %s102, 1
      %p106 = scmp.eq.s32.totalorder %s21, 1
      %p107 = scmp.ne.s32.totalorder %s102, %s104
      %p108 = scmp.eq.s32.totalorder %s21, 0
      %p109 = por %p107, %p108
      %p110 = scmp.ne.s32.totalorder %s102, %s104
      %p111 = scmp.eq.s32.totalorder %s26, 1
      %p112 = por %p110, %p111
      %p113 = scmp.ne.s32.totalorder %s104, %s105
      %p114 = scmp.eq.s32.totalorder %s26, 0
      %p115 = por %p113, %p114
      %p116 = scmp.ne.s32.totalorder %s104, %s105
      %p117 = scmp.eq.s32.totalorder %s27, 1
      %p118 = por %p116, %p117
      %p120 = scmp.ne.s32.totalorder %s105, %s119
      %p121 = scmp.eq.s32.totalorder %s27, 0
      %p122 = por %p120, %p121
      %s124 = sadd.s32 %s123, 1
      %p127 = scmp.eq.s32.totalorder %s21, 1
      %p128 = scmp.ne.s32.totalorder %s123, %s125
      %p129 = scmp.eq.s32.totalorder %s21, 0
      %p130 = por %p128, %p129
      %p131 = scmp.ne.s32.totalorder %s123, %s125
      %p132 = scmp.eq.s32.totalorder %s26, 1
      %p133 = por %p131, %p132
      %p134 = scmp.ne.s32.totalorder %s125, %s126
      %p135 = scmp.eq.s32.totalorder %s26, 0
      %p136 = por %p134, %p135
      %p137 = scmp.ne.s32.totalorder %s125, %s126
      %p138 = scmp.eq.s32.totalorder %s27, 1
      %p139 = por %p137, %p138
      %p141 = scmp.ne.s32.totalorder %s126, %s140
      %p142 = scmp.eq.s32.totalorder %s27, 0
      %p143 = por %p141, %p142
      %s145 = sadd.s32 %s144, 1
      %p148 = scmp.eq.s32.totalorder %s21, 1
      %p149 = scmp.ne.s32.totalorder %s144, %s146
      %p150 = scmp.eq.s32.totalorder %s21, 0
      %p151 = por %p149, %p150
      %p152 = scmp.ne.s32.totalorder %s144, %s146
      %p153 = scmp.eq.s32.totalorder %s26, 1
      %p154 = por %p152, %p153
      %p155 = scmp.ne.s32.totalorder %s146, %s147
      %p156 = scmp.eq.s32.totalorder %s26, 0
      %p157 = por %p155, %p156
      %p158 = scmp.ne.s32.totalorder %s146, %s147
      %p159 = scmp.eq.s32.totalorder %s27, 1
      %p160 = por %p158, %p159
      %p162 = scmp.ne.s32.totalorder %s147, %s161
      %p163 = scmp.eq.s32.totalorder %s27, 0
      %p164 = por %p162, %p163
      %s166 = sadd.s32 %s165, 1
      %p169 = scmp.eq.s32.totalorder %s21, 1
      %p170 = scmp.ne.s32.totalorder %s165, %s167
      %p171 = scmp.eq.s32.totalorder %s21, 0
      %p172 = por %p170, %p171
      %p173 = scmp.ne.s32.totalorder %s165, %s167
      %p174 = scmp.eq.s32.totalorder %s26, 1
      %p175 = por %p173, %p174
      %p176 = scmp.ne.s32.totalorder %s167, %s168
      %p177 = scmp.eq.s32.totalorder %s26, 0
      %p178 = por %p176, %p177
      %p179 = scmp.ne.s32.totalorder %s167, %s168
      %p180 = scmp.eq.s32.totalorder %s27, 1
      %p181 = por %p179, %p180
      %p183 = scmp.ne.s32.totalorder %s168, %s182
      %p184 = scmp.eq.s32.totalorder %s27, 0
      %p185 = por %p183, %p184
      %s187 = sadd.s32 %s186, 1
      %p190 = scmp.eq.s32.totalorder %s21, 1
      %p191 = scmp.ne.s32.totalorder %s186, %s188
      %p192 = scmp.eq.s32.totalorder %s21, 0
      %p193 = por %p191, %p192
      %p194 = scmp.ne.s32.totalorder %s186, %s188
      %p195 = scmp.eq.s32.totalorder %s26, 1
      %p196 = por %p194, %p195
      %p197 = scmp.ne.s32.totalorder %s188, %s189
      %p198 = scmp.eq.s32.totalorder %s26, 0
      %p199 = por %p197, %p198
      %p200 = scmp.ne.s32.totalorder %s188, %s189
      %p201 = scmp.eq.s32.totalorder %s27, 1
      %p202 = por %p200, %p201
      %p204 = scmp.ne.s32.totalorder %s189, %s203
      %p205 = scmp.eq.s32.totalorder %s27, 0
      %p206 = por %p204, %p205
      %s208 = sadd.s32 %s207, 1
      %p211 = scmp.eq.s32.totalorder %s21, 1
      %p212 = scmp.ne.s32.totalorder %s207, %s209
      %p213 = scmp.eq.s32.totalorder %s21, 0
      %p214 = por %p212, %p213
      %p215 = scmp.ne.s32.totalorder %s207, %s209
      %p216 = scmp.eq.s32.totalorder %s26, 1
      %p217 = por %p215, %p216
      %p218 = scmp.ne.s32.totalorder %s209, %s210
      %p219 = scmp.eq.s32.totalorder %s26, 0
      %p220 = por %p218, %p219
      %p221 = scmp.ne.s32.totalorder %s209, %s210
      %p222 = scmp.eq.s32.totalorder %s27, 1
      %p223 = por %p221, %p222
      %p225 = scmp.ne.s32.totalorder %s210, %s224
      %p226 = scmp.eq.s32.totalorder %s27, 0
      %p227 = por %p225, %p226
      %s229 = sadd.s32 %s228, 1
      %p232 = scmp.eq.s32.totalorder %s21, 1
      %p233 = scmp.ne.s32.totalorder %s228, %s230
      %p234 = scmp.eq.s32.totalorder %s21, 0
      %p235 = por %p233, %p234
      %p236 = scmp.ne.s32.totalorder %s228, %s230
      %p237 = scmp.eq.s32.totalorder %s26, 1
      %p238 = por %p236, %p237
      %p239 = scmp.ne.s32.totalorder %s230, %s231
      %p240 = scmp.eq.s32.totalorder %s26, 0
      %p241 = por %p239, %p240
      %p242 = scmp.ne.s32.totalorder %s230, %s231
      %p243 = scmp.eq.s32.totalorder %s27, 1
      %p244 = por %p242, %p243
      %p246 = scmp.ne.s32.totalorder %s231, %s245
      %p247 = scmp.eq.s32.totalorder %s27, 0
      %p248 = por %p246, %p247
      %s249 = ssub.s32 %s21, %s28
      %p250 = scmp.eq.s32.totalorder %s249, 0
      %s252 = sadd.s32 %s251, 1
      %s253 = scalar_select %p250, %s251, %s252
      %p256 = pneg %p250
      %p257 = scmp.eq.s32.totalorder %s21, 1
      %p258 = por %p256, %p257
      %p259 = scmp.ne.s32.totalorder %s251, %s254
      %p260 = scmp.eq.s32.totalorder %s21, 0
      %p261 = por %p259, %p260
      %p262 = scmp.ne.s32.totalorder %s251, %s254
      %p263 = scmp.eq.s32.totalorder %s26, 1
      %p264 = por %p262, %p263
      %p265 = scmp.ne.s32.totalorder %s254, %s255
      %p266 = scmp.eq.s32.totalorder %s26, 0
      %p267 = por %p265, %p266
      %p268 = scmp.ne.s32.totalorder %s254, %s255
      %p269 = scmp.eq.s32.totalorder %s27, 1
      %p270 = por %p268, %p269
      %p272 = scmp.ne.s32.totalorder %s255, %s271
      %p273 = scmp.eq.s32.totalorder %s27, 0
      %p274 = por %p272, %p273
      %p275 = scmp.le.s32.totalorder 1, %s21
      %p276 = scmp.lt.s32.totalorder %s21, 3
      %p277 = pnand %p275, %p276
      %p278 = pneg %p277
      // Predicated region
      $region9: #{tpu_custom_call.1} parent=5 // pred_check
        _
      $region10: #{tpu_custom_call.1} parent=5 // pred_check_branch
        %280 = sbr.rel (%p277) target = $region12
      $region11: #{tpu_custom_call.1} parent=5 // pred_region
        %s281 = ssub.s32 %s21, 1
        // Predicated region
        $region13: #{tpu_custom_call.1} parent=11 // pred_check
          %p282 = pneg %p94
        $region14: #{tpu_custom_call.1} parent=11 // pred_check_branch
          %284 = sbr.rel (%p282) target = $region16
        $region15: #{tpu_custom_call.1} parent=11 // pred_region
          _
        $region16: #{tpu_custom_call.1} parent=11 // pred_fallthru
          _
        // Predicated region
        $region17: #{tpu_custom_call.1} parent=11 // pred_check
          %p285 = pneg %p115
        $region18: #{tpu_custom_call.1} parent=11 // pred_check_branch
          %287 = sbr.rel (%p285) target = $region20
        $region19: #{tpu_custom_call.1} parent=11 // pred_region
          _
        $region20: #{tpu_custom_call.1} parent=11 // pred_fallthru
          _
        // Predicated region
        $region21: #{tpu_custom_call.1} parent=11 // pred_check
          %p288 = pneg %p136
        $region22: #{tpu_custom_call.1} parent=11 // pred_check_branch
          %290 = sbr.rel (%p288) target = $region24
        $region23: #{tpu_custom_call.1} parent=11 // pred_region
          %s292 = ssub.s32 6144, 6144
          %293 = vsyncadd [#allocation3], %s292
          %s294 = sshll.u32 [#allocation2], 4
          %s295 = int_to_ptr.vmem [resolvable:$true] %s294
          %300 = dma.hbm_to_vmem [thread:$0]  %s4, 6144, %s295, [#allocation3], 512, 512, 32
        $region24: #{tpu_custom_call.1} parent=11 // pred_fallthru
          _
        // Predicated region
        $region25: #{tpu_custom_call.1} parent=11 // pred_check
          %p301 = pneg %p157
        $region26: #{tpu_custom_call.1} parent=11 // pred_check_branch
          %303 = sbr.rel (%p301) target = $region28
        $region27: #{tpu_custom_call.1} parent=11 // pred_region
          _
        $region28: #{tpu_custom_call.1} parent=11 // pred_fallthru
          _
        // Predicated region
        $region29: #{tpu_custom_call.1} parent=11 // pred_check
          %p304 = pneg %p178
        $region30: #{tpu_custom_call.1} parent=11 // pred_check_branch
          %306 = sbr.rel (%p304) target = $region32
        $region31: #{tpu_custom_call.1} parent=11 // pred_region
          _
        $region32: #{tpu_custom_call.1} parent=11 // pred_fallthru
          _
        // Predicated region
        $region33: #{tpu_custom_call.1} parent=11 // pred_check
          %p307 = pneg %p199
        $region34: #{tpu_custom_call.1} parent=11 // pred_check_branch
          %309 = sbr.rel (%p307) target = $region36
        $region35: #{tpu_custom_call.1} parent=11 // pred_region
          _
        $region36: #{tpu_custom_call.1} parent=11 // pred_fallthru
          _
        // Predicated region
        $region37: #{tpu_custom_call.1} parent=11 // pred_check
          %p310 = pneg %p220
        $region38: #{tpu_custom_call.1} parent=11 // pred_check_branch
          %312 = sbr.rel (%p310) target = $region40
        $region39: #{tpu_custom_call.1} parent=11 // pred_region
          _
        $region40: #{tpu_custom_call.1} parent=11 // pred_fallthru
          _
        // Predicated region
        $region41: #{tpu_custom_call.1} parent=11 // pred_check
          %p313 = pneg %p241
        $region42: #{tpu_custom_call.1} parent=11 // pred_check_branch
          %315 = sbr.rel (%p313) target = $region44
        $region43: #{tpu_custom_call.1} parent=11 // pred_region
          %s317 = ssub.s32 256, 256
          %318 = vsyncadd [#allocation6], %s317
          %s319 = sshll.u32 [#allocation5], 4
          %s320 = int_to_ptr.vmem [resolvable:$true] %s319
          %325 = dma.hbm_to_vmem [thread:$0]  %s9, 256, %s320, [#allocation6], 128, 128, 8
        $region44: #{tpu_custom_call.1} parent=11 // pred_fallthru
          _
      $region12: #{tpu_custom_call.1} parent=5 // pred_fallthru
        _
      %p326 = scmp.lt.s32.totalorder %s21, 2
      // Predicated region
      $region45: #{tpu_custom_call.1} parent=5 // pred_check
        %p327 = pneg %p326
      $region46: #{tpu_custom_call.1} parent=5 // pred_check_branch
        %329 = sbr.rel (%p327) target = $region48
      $region47: #{tpu_custom_call.1} parent=5 // pred_region
        // Predicated region
        $region49: #{tpu_custom_call.1} parent=47 // pred_check
          %p330 = pneg %p41
        $region50: #{tpu_custom_call.1} parent=47 // pred_check_branch
          %332 = sbr.rel (%p330) target = $region52
        $region51: #{tpu_custom_call.1} parent=47 // pred_region
          %p333 = scmp.lt.s32.totalorder %s21, 1
          %s334 = scalar_select %p333, %s21, 1
          %s335 = smul.addr %s334, 16
          %s336 = smul.addr %s335, 8
          %s337 = scalar_lea.vmem %s0, %s336
        $region52: #{tpu_custom_call.1} parent=47 // pred_fallthru
          _
        // Predicated region
        $region53: #{tpu_custom_call.1} parent=47 // pred_check
          %p338 = pneg %p67
        $region54: #{tpu_custom_call.1} parent=47 // pred_check_branch
          %340 = sbr.rel (%p338) target = $region56
        $region55: #{tpu_custom_call.1} parent=47 // pred_region
          %p341 = scmp.lt.s32.totalorder %s21, 1
          %s342 = scalar_select %p341, %s21, 1
          %s343 = smul.addr %s342, 2
          %s344 = smul.addr %s343, 8
          %s345 = scalar_lea.vmem %s1, %s344
        $region56: #{tpu_custom_call.1} parent=47 // pred_fallthru
          _
      $region48: #{tpu_custom_call.1} parent=5 // pred_fallthru
        _
      %p346 = scmp.le.s32.totalorder 1, %s21
      %p347 = scmp.lt.s32.totalorder %s21, 3
      %p348 = pnand %p346, %p347
      %p349 = pneg %p348
      // Predicated region
      $region57: #{tpu_custom_call.1} parent=5 // pred_check
        _
      $region58: #{tpu_custom_call.1} parent=5 // pred_check_branch
        %351 = sbr.rel (%p348) target = $region60
      $region59: #{tpu_custom_call.1} parent=5 // pred_region
        %s352 = ssub.s32 %s21, 1
        // Predicated region
        $region61: #{tpu_custom_call.1} parent=59 // pred_check
          %p353 = pneg %p136
        $region62: #{tpu_custom_call.1} parent=59 // pred_check_branch
          %355 = sbr.rel (%p353) target = $region64
        $region63: #{tpu_custom_call.1} parent=59 // pred_region
          %356 = dma.done [#allocation3], 6144
        $region64: #{tpu_custom_call.1} parent=59 // pred_fallthru
          _
        // Predicated region
        $region65: #{tpu_custom_call.1} parent=59 // pred_check
          %p357 = pneg %p241
        $region66: #{tpu_custom_call.1} parent=59 // pred_check_branch
          %359 = sbr.rel (%p357) target = $region68
        $region67: #{tpu_custom_call.1} parent=59 // pred_region
          %360 = dma.done [#allocation6], 256
        $region68: #{tpu_custom_call.1} parent=59 // pred_fallthru
          _
        %p361 = scmp.lt.s32.totalorder %s26, 1
        %s362 = scalar_select %p361, %s26, 1
        %s363 = smul.addr %s362, 16
        %s364 = smul.addr %s363, 8
        %s365 = scalar_lea.vmem %s0, %s364
        %p366 = pneg %p47
        %p367 = pneg %p44
        %p368 = scmp.lt.s32.totalorder %s26, 1
        %s369 = scalar_select %p368, %s26, 1
        %s370 = smul.addr %s369, 2
        %s371 = smul.addr %s370, 8
        %s372 = scalar_lea.vmem %s1, %s371
        %p373 = pneg %p73
        %p374 = pneg %p70
        %p375 = pneg %p94
        %p376 = pneg %p91
        %p377 = pneg %p115
        %p378 = pneg %p112
        %p379 = pneg %p136
        %p380 = pneg %p133
        %p381 = pneg %p157
        %p382 = pneg %p154
        %p383 = pneg %p178
        %p384 = pneg %p175
        %p385 = pneg %p199
        %p386 = pneg %p196
        %p387 = pneg %p220
        %p388 = pneg %p217
        %p389 = pneg %p241
        %p390 = pneg %p238
        %p391 = pneg %p267
        %p392 = pneg %p264
        %s393 = sand.u32 %s254, 1
        %s394 = scalar_lea.sflag [#allocation4], %s393
        %s395 = sand.u32 %s254, 1
        %s396 = smul.addr %s395, 128
        %s397 = scalar_lea.vmem [#allocation7], %s396
        %p398 = scmp.lt.s32.totalorder %s26, 1
        %s399 = scalar_select %p398, %s26, 1
        %s400 = smul.addr %s399, 16
        %s401 = smul.addr %s400, 8
        %s402 = scalar_lea.vmem %s0, %s401
        %p403 = scmp.lt.s32.totalorder %s26, 1
        %s404 = scalar_select %p403, %s26, 1
        %s405 = smul.addr %s404, 2
        %s406 = smul.addr %s405, 8
        %s407 = scalar_lea.vmem %s1, %s406
        %v408 = vld [vmem:[%s2] sm:$0xff]
        %v409 = vld [vmem:[%s2 + $0x8] sm:$0xff]
        %v410 = vld [vmem:[%s2 + $0x10] sm:$0xff]
        %v411 = vld [vmem:[%s2 + $0x18] sm:$0xff]
        %v412 = vld [vmem:[%s2 + $0x20] sm:$0xff]
        %v413 = vld [vmem:[%s2 + $0x28] sm:$0xff]
        %v414 = vld [vmem:[%s3] sm:$0xff]
        %v415 = vld [vmem:[%s3 + $0x8] sm:$0xf]
        %v416 = vld [vmem:[%s3 + $0xc] sm:$0xff]
        %v417 = vld [vmem:[%s3 + $0x14] sm:$0xf]
        %v418 = vld [vmem:[%s3 + $0x18] sm:$0xff]
        %v419 = vld [vmem:[%s3 + $0x20] sm:$0xf]
        %v420 = vld [vmem:[#allocation2] sm:$0xff]
        %v421 = vld [vmem:[#allocation2 + $0x8] sm:$0xff]
        %v422 = vld [vmem:[#allocation2 + $0x10] sm:$0xff]
        %v423 = vld [vmem:[#allocation2 + $0x18] sm:$0xff]
        %v424 = vld [vmem:[#allocation2 + $0x20] sm:$0xff]
        %v425 = vld [vmem:[#allocation2 + $0x28] sm:$0xff]
        %v426 = vld [vmem:[#allocation2 + $0x30] sm:$0xff]
        %v427 = vld [vmem:[#allocation2 + $0x38] sm:$0xff]
        %v428 = vld [vmem:[#allocation2 + $0x40] sm:$0xff]
        %v429 = vld [vmem:[#allocation2 + $0x48] sm:$0xff]
        %v430 = vld [vmem:[#allocation2 + $0x50] sm:$0xff]
        %v431 = vld [vmem:[#allocation2 + $0x58] sm:$0xff]
        %v432 = vld [vmem:[#allocation2 + $0x60] sm:$0xff]
        %v433 = vld [vmem:[#allocation2 + $0x68] sm:$0xff]
        %v434 = vld [vmem:[#allocation2 + $0x70] sm:$0xff]
        %v435 = vld [vmem:[#allocation2 + $0x78] sm:$0xff]
        %v436 = vld [vmem:[#allocation2 + $0x80] sm:$0xff]
        %v437 = vld [vmem:[#allocation2 + $0x88] sm:$0xff]
        %v438 = vld [vmem:[#allocation2 + $0x90] sm:$0xff]
        %v439 = vld [vmem:[#allocation2 + $0x98] sm:$0xff]
        %v440 = vld [vmem:[#allocation2 + $0xa0] sm:$0xff]
        %v441 = vld [vmem:[#allocation2 + $0xa8] sm:$0xff]
        %v442 = vld [vmem:[#allocation2 + $0xb0] sm:$0xff]
        %v443 = vld [vmem:[#allocation2 + $0xb8] sm:$0xff]
        %v444 = vld [vmem:[#allocation2 + $0xc0] sm:$0xff]
        %v445 = vld [vmem:[#allocation2 + $0xc8] sm:$0xff]
        %v446 = vld [vmem:[#allocation2 + $0xd0] sm:$0xff]
        %v447 = vld [vmem:[#allocation2 + $0xd8] sm:$0xff]
        %v448 = vld [vmem:[#allocation2 + $0xe0] sm:$0xff]
        %v449 = vld [vmem:[#allocation2 + $0xe8] sm:$0xff]
        %v450 = vld [vmem:[#allocation2 + $0xf0] sm:$0xff]
        %v451 = vld [vmem:[#allocation2 + $0xf8] sm:$0xff]
        %v452 = vld [vmem:[#allocation2 + $0x100] sm:$0xff]
        %v453 = vld [vmem:[#allocation2 + $0x108] sm:$0xff]
        %v454 = vld [vmem:[#allocation2 + $0x110] sm:$0xff]
        %v455 = vld [vmem:[#allocation2 + $0x118] sm:$0xff]
        %v456 = vld [vmem:[#allocation2 + $0x120] sm:$0xff]
        %v457 = vld [vmem:[#allocation2 + $0x128] sm:$0xff]
        %v458 = vld [vmem:[#allocation2 + $0x130] sm:$0xff]
        %v459 = vld [vmem:[#allocation2 + $0x138] sm:$0xff]
        %v460 = vld [vmem:[#allocation2 + $0x140] sm:$0xff]
        %v461 = vld [vmem:[#allocation2 + $0x148] sm:$0xff]
        %v462 = vld [vmem:[#allocation2 + $0x150] sm:$0xff]
        %v463 = vld [vmem:[#allocation2 + $0x158] sm:$0xff]
        %v464 = vld [vmem:[#allocation2 + $0x160] sm:$0xff]
        %v465 = vld [vmem:[#allocation2 + $0x168] sm:$0xff]
        %v466 = vld [vmem:[#allocation2 + $0x170] sm:$0xff]
        %v467 = vld [vmem:[#allocation2 + $0x178] sm:$0xff]
        %v468 = vld [vmem:[%s5] sm:$0xff]
        %v469 = vld [vmem:[%s5 + $0x8] sm:$0xff]
        %v470 = vld [vmem:[%s5 + $0x10] sm:$0xff]
        %v471 = vld [vmem:[%s5 + $0x18] sm:$0xff]
        %v472 = vld [vmem:[%s5 + $0x20] sm:$0xff]
        %v473 = vld [vmem:[%s5 + $0x28] sm:$0xff]
        %v474 = vld [vmem:[%s5 + $0x30] sm:$0xff]
        %v475 = vld [vmem:[%s5 + $0x38] sm:$0xff]
        %v476 = vld [vmem:[%s5 + $0x40] sm:$0xff]
        %v477 = vld [vmem:[%s5 + $0x48] sm:$0xff]
        %v478 = vld [vmem:[%s5 + $0x50] sm:$0xff]
        %v479 = vld [vmem:[%s5 + $0x58] sm:$0xff]
        %v480 = vld [vmem:[%s5 + $0x60] sm:$0xff]
        %v481 = vld [vmem:[%s5 + $0x68] sm:$0xff]
        %v482 = vld [vmem:[%s5 + $0x70] sm:$0xff]
        %v483 = vld [vmem:[%s5 + $0x78] sm:$0xff]
        %v484 = vld [vmem:[%s5 + $0x80] sm:$0xff]
        %v485 = vld [vmem:[%s5 + $0x88] sm:$0xff]
        %v486 = vld [vmem:[%s5 + $0x90] sm:$0xff]
        %v487 = vld [vmem:[%s5 + $0x98] sm:$0xff]
        %v488 = vld [vmem:[%s5 + $0xa0] sm:$0xff]
        %v489 = vld [vmem:[%s5 + $0xa8] sm:$0xff]
        %v490 = vld [vmem:[%s5 + $0xb0] sm:$0xff]
        %v491 = vld [vmem:[%s5 + $0xb8] sm:$0xff]
        %v492 = vld [vmem:[%s6] sm:$0xff]
        %v493 = vld [vmem:[%s6 + $0x8] sm:$0xff]
        %v494 = vld [vmem:[%s6 + $0x10] sm:$0xff]
        %v495 = vld [vmem:[%s6 + $0x18] sm:$0xff]
        %v496 = vld [vmem:[%s6 + $0x20] sm:$0xff]
        %v497 = vld [vmem:[%s6 + $0x28] sm:$0xff]
        %v498 = vld [vmem:[%s6 + $0x30] sm:$0xff]
        %v499 = vld [vmem:[%s6 + $0x38] sm:$0xff]
        %v500 = vld [vmem:[%s7] sm:$0xff]
        %v501 = vld [vmem:[%s7 + $0x8] sm:$0xff]
        %v502 = vld [vmem:[%s7 + $0x10] sm:$0xff]
        %v503 = vld [vmem:[%s7 + $0x18] sm:$0xff]
        %v504 = vld [vmem:[%s8] sm:$0xff]
        %v505 = vld [vmem:[%s8 + $0x8] sm:$0xff]
        %v506 = vld [vmem:[#allocation5] sm:$0xff]
        %v507 = vld [vmem:[#allocation5 + $0x8] sm:$0xff]
        %v508 = vld [vmem:[%s407] sm:$0xff]
        %v509 = vld [vmem:[%s407 + $0x8] sm:$0xff]
        loop: start=0, step=1, limit=8
        $region69: #{tpu_custom_call.1} parent=59 // loop_pre_header
          _
        $region70: #{tpu_custom_call.1} parent=59 // loop_header
          %s511 = sphi 0, %s515
          %p512 = scmp.ge.s32.totalorder %s511, 8
          %v516 = vphi %v508, %v2580
          %v517 = vphi %v509, %v2581
        $region71: #{tpu_custom_call.1} parent=59 // loop_header_branch
          %514 = sbr.rel (%p512) target = $region75
        $region72: #{tpu_custom_call.1} parent=59 // loop_body
          %s518 = smul.u32 %s511, 16
          %s519 = scalar_lea.vmem %s402, %s518
          %v520 = vld [vmem:[%s519] sm:$0xff]
          %v521 = vld [vmem:[%s519 + $0x8] sm:$0xff]
          %vm522 = vcmask 130048
          %v524 = vsel %vm522, %v408, 0
          %v527 = vsel %vm522, %v409, 0
          %v530 = vsel %vm522, %v410, 0
          %v533 = vsel %vm522, %v411, 0
          %v536 = vsel %vm522, %v412, 0
          %v539 = vsel %vm522, %v413, 0
          %541 = vmatprep.subr.mxu0 0.0
          %542 = vmatpush1.msra.mxu0 %v520
          %543 = vmatprep.subr.mxu0 0.0
          %544 = vmatpush1.msra.mxu0 %v521
          %545 = vmatprep.subr.mxu0 0.0
          %546 = vmatpush1.msra.mxu0 0.0
          %547 = vmatprep.subr.mxu0 0.0
          %548 = vmatpush1.msra.mxu0 0.0
          %549 = vmatprep.subr.mxu0 0.0
          %550 = vmatpush1.msra.mxu0 0.0
          %551 = vmatprep.subr.mxu0 0.0
          %552 = vmatpush1.msra.mxu0 0.0
          %553 = vmatprep.subr.mxu0 0.0
          %554 = vmatpush1.msra.mxu0 0.0
          %555 = vmatprep.subr.mxu0 0.0
          %556 = vmatpush1.msra.mxu0 0.0
          %557 = vmatprep.subr.mxu0 0.0
          %558 = vmatpush1.msra.mxu0 0.0
          %559 = vmatprep.subr.mxu0 0.0
          %560 = vmatpush1.msra.mxu0 0.0
          %561 = vmatprep.subr.mxu0 0.0
          %562 = vmatpush1.msra.mxu0 0.0
          %563 = vmatprep.subr.mxu0 0.0
          %564 = vmatpush1.msra.mxu0 0.0
          %565 = vmatprep.subr.mxu0 0.0
          %566 = vmatpush1.msra.mxu0 0.0
          %567 = vmatprep.subr.mxu0 0.0
          %568 = vmatpush1.msra.mxu0 0.0
          %569 = vmatprep.subr.mxu0 0.0
          %570 = vmatpush1.msra.mxu0 0.0
          %571 = vmatprep.subr.mxu0 0.0
          %572 = vmatpush1.msra.mxu0 0.0
          %573 = vmatprep.subr.mxu0 0.0
          %574 = vmatpush1.msra.mxu0 0.0
          %575 = vmatprep.subr.mxu0 0.0
          %576 = vmatpush1.msra.mxu0 0.0
          %577 = vmatprep.subr.mxu0 0.0
          %578 = vmatpush1.msra.mxu0 0.0
          %579 = vmatprep.subr.mxu0 0.0
          %580 = vmatpush1.msra.mxu0 0.0
          %581 = vmatprep.subr.mxu0 0.0
          %582 = vmatpush1.msra.mxu0 0.0
          %583 = vmatprep.subr.mxu0 0.0
          %584 = vmatpush1.msra.mxu0 0.0
          %585 = vmatprep.subr.mxu0 0.0
          %586 = vmatpush1.msra.mxu0 0.0
          %587 = vmatprep.subr.mxu0 0.0
          %588 = vmatpush1.msra.mxu0 0.0
          %589 = vmatprep.subr.mxu0 0.0
          %590 = vmatpush1.msra.mxu0 0.0
          %591 = vmatprep.subr.mxu0 0.0
          %592 = vmatpush1.msra.mxu0 0.0
          %593 = vmatprep.subr.mxu0 0.0
          %594 = vmatpush1.msra.mxu0 0.0
          %595 = vmatprep.subr.mxu0 0.0
          %596 = vmatpush1.msra.mxu0 0.0
          %597 = vmatprep.subr.mxu0 0.0
          %598 = vmatpush1.msra.mxu0 0.0
          %599 = vmatprep.subr.mxu0 0.0
          %600 = vmatpush1.msra.mxu0 0.0
          %601 = vmatprep.subr.mxu0 0.0
          %602 = vmatpush1.msra.mxu0 0.0
          %603 = vmatprep.subr.mxu0 0.0
          %604 = vmatpush1.msra.mxu0 0.0
          %605 = vmatprep.mubr.f32.mxu0 0.0
          %606 = vmatmul.mubr.f32.gmra.mrb[0].mxu0 %v524
          %v607 = vpop.f32.mrb[0].mxu0
          %v608 = vadd.f32 0.0, %v607
          %v609 = vpop.f32.mrb[0].mxu0
          %610 = vmatprep.mubr.f32.mxu0 0.0
          %611 = vmatmul.mubr.f32.gmra.mrb[0].mxu0 %v527
          %v612 = vpop.f32.mrb[0].mxu0
          %v613 = vadd.f32 0.0, %v612
          %v614 = vpop.f32.mrb[0].mxu0
          %615 = vmatprep.mubr.f32.mxu0 0.0
          %616 = vmatmul.mubr.f32.gmra.mrb[0].mxu0 %v530
          %v617 = vpop.f32.mrb[0].mxu0
          %v618 = vadd.f32 0.0, %v617
          %v619 = vpop.f32.mrb[0].mxu0
          %620 = vmatprep.mubr.f32.mxu0 0.0
          %621 = vmatmul.mubr.f32.gmra.mrb[0].mxu0 %v533
          %v622 = vpop.f32.mrb[0].mxu0
          %v623 = vadd.f32 0.0, %v622
          %v624 = vpop.f32.mrb[0].mxu0
          %625 = vmatprep.mubr.f32.mxu0 0.0
          %626 = vmatmul.mubr.f32.gmra.mrb[0].mxu0 %v536
          %v627 = vpop.f32.mrb[0].mxu0
          %v628 = vadd.f32 0.0, %v627
          %v629 = vpop.f32.mrb[0].mxu0
          %630 = vmatprep.mubr.f32.mxu0 0.0
          %631 = vmatmul.mubr.f32.gmra.mrb[0].mxu0 %v539
          %v632 = vpop.f32.mrb[0].mxu0
          %v633 = vadd.f32 0.0, %v632
          %v634 = vpop.f32.mrb[0].mxu0
          %635 = vdwg.mxu0
          %636 = vmatprep.subr.mxu0 0.0
          %637 = vmatpush1.msra.mxu0 %v516
          %638 = vmatprep.subr.mxu0 0.0
          %639 = vmatpush1.msra.mxu0 %v517
          %640 = vmatprep.subr.mxu0 0.0
          %641 = vmatpush1.msra.mxu0 0.0
          %642 = vmatprep.subr.mxu0 0.0
          %643 = vmatpush1.msra.mxu0 0.0
          %644 = vmatprep.subr.mxu0 0.0
          %645 = vmatpush1.msra.mxu0 0.0
          %646 = vmatprep.subr.mxu0 0.0
          %647 = vmatpush1.msra.mxu0 0.0
          %648 = vmatprep.subr.mxu0 0.0
          %649 = vmatpush1.msra.mxu0 0.0
          %650 = vmatprep.subr.mxu0 0.0
          %651 = vmatpush1.msra.mxu0 0.0
          %652 = vmatprep.subr.mxu0 0.0
          %653 = vmatpush1.msra.mxu0 0.0
          %654 = vmatprep.subr.mxu0 0.0
          %655 = vmatpush1.msra.mxu0 0.0
          %656 = vmatprep.subr.mxu0 0.0
          %657 = vmatpush1.msra.mxu0 0.0
          %658 = vmatprep.subr.mxu0 0.0
          %659 = vmatpush1.msra.mxu0 0.0
          %660 = vmatprep.subr.mxu0 0.0
          %661 = vmatpush1.msra.mxu0 0.0
          %662 = vmatprep.subr.mxu0 0.0
          %663 = vmatpush1.msra.mxu0 0.0
          %664 = vmatprep.subr.mxu0 0.0
          %665 = vmatpush1.msra.mxu0 0.0
          %666 = vmatprep.subr.mxu0 0.0
          %667 = vmatpush1.msra.mxu0 0.0
          %668 = vmatprep.subr.mxu0 0.0
          %669 = vmatpush1.msra.mxu0 0.0
          %670 = vmatprep.subr.mxu0 0.0
          %671 = vmatpush1.msra.mxu0 0.0
          %672 = vmatprep.subr.mxu0 0.0
          %673 = vmatpush1.msra.mxu0 0.0
          %674 = vmatprep.subr.mxu0 0.0
          %675 = vmatpush1.msra.mxu0 0.0
          %676 = vmatprep.subr.mxu0 0.0
          %677 = vmatpush1.msra.mxu0 0.0
          %678 = vmatprep.subr.mxu0 0.0
          %679 = vmatpush1.msra.mxu0 0.0
          %680 = vmatprep.subr.mxu0 0.0
          %681 = vmatpush1.msra.mxu0 0.0
          %682 = vmatprep.subr.mxu0 0.0
          %683 = vmatpush1.msra.mxu0 0.0
          %684 = vmatprep.subr.mxu0 0.0
          %685 = vmatpush1.msra.mxu0 0.0
          %686 = vmatprep.subr.mxu0 0.0
          %687 = vmatpush1.msra.mxu0 0.0
          %688 = vmatprep.subr.mxu0 0.0
          %689 = vmatpush1.msra.mxu0 0.0
          %690 = vmatprep.subr.mxu0 0.0
          %691 = vmatpush1.msra.mxu0 0.0
          %692 = vmatprep.subr.mxu0 0.0
          %693 = vmatpush1.msra.mxu0 0.0
          %694 = vmatprep.subr.mxu0 0.0
          %695 = vmatpush1.msra.mxu0 0.0
          %696 = vmatprep.subr.mxu0 0.0
          %697 = vmatpush1.msra.mxu0 0.0
          %698 = vmatprep.subr.mxu0 0.0
          %699 = vmatpush1.msra.mxu0 0.0
          %700 = vmatprep.mubr.f32.mxu0 0.0
          %701 = vmatmul.mubr.f32.gmra.mrb[0].mxu0 %v524
          %v702 = vpop.f32.mrb[0].mxu0
          %v703 = vadd.f32 0.0, %v702
          %v704 = vpop.f32.mrb[0].mxu0
          %705 = vmatprep.mubr.f32.mxu0 0.0
          %706 = vmatmul.mubr.f32.gmra.mrb[0].mxu0 %v527
          %v707 = vpop.f32.mrb[0].mxu0
          %v708 = vadd.f32 0.0, %v707
          %v709 = vpop.f32.mrb[0].mxu0
          %710 = vmatprep.mubr.f32.mxu0 0.0
          %711 = vmatmul.mubr.f32.gmra.mrb[0].mxu0 %v530
          %v712 = vpop.f32.mrb[0].mxu0
          %v713 = vadd.f32 0.0, %v712
          %v714 = vpop.f32.mrb[0].mxu0
          %715 = vmatprep.mubr.f32.mxu0 0.0
          %716 = vmatmul.mubr.f32.gmra.mrb[0].mxu0 %v533
          %v717 = vpop.f32.mrb[0].mxu0
          %v718 = vadd.f32 0.0, %v717
          %v719 = vpop.f32.mrb[0].mxu0
          %720 = vmatprep.mubr.f32.mxu0 0.0
          %721 = vmatmul.mubr.f32.gmra.mrb[0].mxu0 %v536
          %v722 = vpop.f32.mrb[0].mxu0
          %v723 = vadd.f32 0.0, %v722
          %v724 = vpop.f32.mrb[0].mxu0
          %725 = vmatprep.mubr.f32.mxu0 0.0
          %726 = vmatmul.mubr.f32.gmra.mrb[0].mxu0 %v539
          %v727 = vpop.f32.mrb[0].mxu0
          %v728 = vadd.f32 0.0, %v727
          %v729 = vpop.f32.mrb[0].mxu0
          %730 = vdwg.mxu0
          %v733 = vcombine.high %v416, %v416
          %v735 = vunpack.c.l.s4 1983009808
          %v736 = vunpack.c.0.s8 %v735
          %v737 = vlaneseq
          %v738 = vshrl.u32 %v737, 7
          %v739 = vsub.s32 %v736, %v738
          %v740 = vrot.slane %v416, %v739
          %v742 = vunpack.c.l.s4 1983009808
          %v743 = vunpack.c.0.s8 %v742
          %v744 = vlaneseq
          %v745 = vshrl.u32 %v744, 7
          %v746 = vsub.s32 %v743, %v745
          %v747 = vrot.slane %v733, %v746
          %v748 = vcombine.high %v740, %v740
          %v749 = vcombine.high %v747, %v747
          %v751 = vunpack.c.l.s4 1983009808
          %v752 = vunpack.c.0.s8 %v751
          %v753 = vlaneseq
          %v754 = vshrl.u32 %v753, 7
          %v755 = vsub.s32 %v752, %v754
          %v756 = vrot.slane %v417, %v755
          %v757 = vcombine.high %v756, %v756
          %vm758 = vcmask 15360
          %v760 = vsel %vm758, %v618, 0
          %v763 = vsel %vm758, %v623, 0
          %vm765 = vcmask 1041408
          %v766 = vsel %vm765, %v740, 0
          %v768 = vsel %vm765, %v748, 0
          %v770 = vsel %vm765, %v747, 0
          %v772 = vsel %vm765, %v749, 0
          %v774 = vsel %vm765, %v756, 0
          %v776 = vsel %vm765, %v757, 0
          %778 = vmatprep.subr.mxu0 %v768
          %779 = vmatpush1.msra.mxu0 %v766
          %780 = vmatprep.subr.mxu0 0.0
          %781 = vmatpush1.msra.mxu0 0.0
          %782 = vmatprep.subr.mxu0 0.0
          %783 = vmatpush1.msra.mxu0 0.0
          %784 = vmatprep.subr.mxu0 0.0
          %785 = vmatpush1.msra.mxu0 0.0
          %786 = vmatprep.subr.mxu0 0.0
          %787 = vmatpush1.msra.mxu0 0.0
          %788 = vmatprep.subr.mxu0 0.0
          %789 = vmatpush1.msra.mxu0 0.0
          %790 = vmatprep.subr.mxu0 0.0
          %791 = vmatpush1.msra.mxu0 0.0
          %792 = vmatprep.subr.mxu0 0.0
          %793 = vmatpush1.msra.mxu0 0.0
          %794 = vmatprep.subr.mxu0 0.0
          %795 = vmatpush1.msra.mxu0 0.0
          %796 = vmatprep.subr.mxu0 0.0
          %797 = vmatpush1.msra.mxu0 0.0
          %798 = vmatprep.subr.mxu0 0.0
          %799 = vmatpush1.msra.mxu0 0.0
          %800 = vmatprep.subr.mxu0 0.0
          %801 = vmatpush1.msra.mxu0 0.0
          %802 = vmatprep.subr.mxu0 0.0
          %803 = vmatpush1.msra.mxu0 0.0
          %804 = vmatprep.subr.mxu0 0.0
          %805 = vmatpush1.msra.mxu0 0.0
          %806 = vmatprep.subr.mxu0 0.0
          %807 = vmatpush1.msra.mxu0 0.0
          %808 = vmatprep.subr.mxu0 0.0
          %809 = vmatpush1.msra.mxu0 0.0
          %810 = vmatprep.subr.mxu0 0.0
          %811 = vmatpush1.msra.mxu0 0.0
          %812 = vmatprep.subr.mxu0 0.0
          %813 = vmatpush1.msra.mxu0 0.0
          %814 = vmatprep.subr.mxu0 0.0
          %815 = vmatpush1.msra.mxu0 0.0
          %816 = vmatprep.subr.mxu0 0.0
          %817 = vmatpush1.msra.mxu0 0.0
          %818 = vmatprep.subr.mxu0 0.0
          %819 = vmatpush1.msra.mxu0 0.0
          %820 = vmatprep.subr.mxu0 0.0
          %821 = vmatpush1.msra.mxu0 0.0
          %822 = vmatprep.subr.mxu0 0.0
          %823 = vmatpush1.msra.mxu0 0.0
          %824 = vmatprep.subr.mxu0 0.0
          %825 = vmatpush1.msra.mxu0 0.0
          %826 = vmatprep.subr.mxu0 0.0
          %827 = vmatpush1.msra.mxu0 0.0
          %828 = vmatprep.subr.mxu0 0.0
          %829 = vmatpush1.msra.mxu0 0.0
          %830 = vmatprep.subr.mxu0 0.0
          %831 = vmatpush1.msra.mxu0 0.0
          %832 = vmatprep.subr.mxu0 0.0
          %833 = vmatpush1.msra.mxu0 0.0
          %834 = vmatprep.subr.mxu0 0.0
          %835 = vmatpush1.msra.mxu0 0.0
          %836 = vmatprep.subr.mxu0 0.0
          %837 = vmatpush1.msra.mxu0 0.0
          %838 = vmatprep.subr.mxu0 0.0
          %839 = vmatpush1.msra.mxu0 0.0
          %840 = vmatprep.subr.mxu0 0.0
          %841 = vmatpush1.msra.mxu0 0.0
          %842 = vmatprep.mubr.f32.mxu0 0.0
          %843 = vmatmul.mubr.f32.gmra.mrb[0].mxu0 %v760
          %v844 = vpop.f32.mrb[0].mxu0
          %v845 = vadd.f32 0.0, %v844
          %v846 = vpop.f32.mrb[0].mxu0
          %v847 = vadd.f32 0.0, %v846
          %848 = vmatprep.mubr.f32.mxu0 0.0
          %849 = vmatmul.mubr.f32.gmra.mrb[0].mxu0 %v763
          %v850 = vpop.f32.mrb[0].mxu0
          %v851 = vadd.f32 0.0, %v850
          %v852 = vpop.f32.mrb[0].mxu0
          %v853 = vadd.f32 0.0, %v852
          %854 = vdwg.mxu0
          %855 = vmatprep.subr.mxu0 %v772
          %856 = vmatpush1.msra.mxu0 %v770
          %857 = vmatprep.subr.mxu0 0.0
          %858 = vmatpush1.msra.mxu0 0.0
          %859 = vmatprep.subr.mxu0 0.0
          %860 = vmatpush1.msra.mxu0 0.0
          %861 = vmatprep.subr.mxu0 0.0
          %862 = vmatpush1.msra.mxu0 0.0
          %863 = vmatprep.subr.mxu0 0.0
          %864 = vmatpush1.msra.mxu0 0.0
          %865 = vmatprep.subr.mxu0 0.0
          %866 = vmatpush1.msra.mxu0 0.0
          %867 = vmatprep.subr.mxu0 0.0
          %868 = vmatpush1.msra.mxu0 0.0
          %869 = vmatprep.subr.mxu0 0.0
          %870 = vmatpush1.msra.mxu0 0.0
          %871 = vmatprep.subr.mxu0 0.0
          %872 = vmatpush1.msra.mxu0 0.0
          %873 = vmatprep.subr.mxu0 0.0
          %874 = vmatpush1.msra.mxu0 0.0
          %875 = vmatprep.subr.mxu0 0.0
          %876 = vmatpush1.msra.mxu0 0.0
          %877 = vmatprep.subr.mxu0 0.0
          %878 = vmatpush1.msra.mxu0 0.0
          %879 = vmatprep.subr.mxu0 0.0
          %880 = vmatpush1.msra.mxu0 0.0
          %881 = vmatprep.subr.mxu0 0.0
          %882 = vmatpush1.msra.mxu0 0.0
          %883 = vmatprep.subr.mxu0 0.0
          %884 = vmatpush1.msra.mxu0 0.0
          %885 = vmatprep.subr.mxu0 0.0
          %886 = vmatpush1.msra.mxu0 0.0
          %887 = vmatprep.subr.mxu0 0.0
          %888 = vmatpush1.msra.mxu0 0.0
          %889 = vmatprep.subr.mxu0 0.0
          %890 = vmatpush1.msra.mxu0 0.0
          %891 = vmatprep.subr.mxu0 0.0
          %892 = vmatpush1.msra.mxu0 0.0
          %893 = vmatprep.subr.mxu0 0.0
          %894 = vmatpush1.msra.mxu0 0.0
          %895 = vmatprep.subr.mxu0 0.0
          %896 = vmatpush1.msra.mxu0 0.0
          %897 = vmatprep.subr.mxu0 0.0
          %898 = vmatpush1.msra.mxu0 0.0
          %899 = vmatprep.subr.mxu0 0.0
          %900 = vmatpush1.msra.mxu0 0.0
          %901 = vmatprep.subr.mxu0 0.0
          %902 = vmatpush1.msra.mxu0 0.0
          %903 = vmatprep.subr.mxu0 0.0
          %904 = vmatpush1.msra.mxu0 0.0
          %905 = vmatprep.subr.mxu0 0.0
          %906 = vmatpush1.msra.mxu0 0.0
          %907 = vmatprep.subr.mxu0 0.0
          %908 = vmatpush1.msra.mxu0 0.0
          %909 = vmatprep.subr.mxu0 0.0
          %910 = vmatpush1.msra.mxu0 0.0
          %911 = vmatprep.subr.mxu0 0.0
          %912 = vmatpush1.msra.mxu0 0.0
          %913 = vmatprep.subr.mxu0 0.0
          %914 = vmatpush1.msra.mxu0 0.0
          %915 = vmatprep.subr.mxu0 0.0
          %916 = vmatpush1.msra.mxu0 0.0
          %917 = vmatprep.subr.mxu0 0.0
          %918 = vmatpush1.msra.mxu0 0.0
          %919 = vmatprep.mubr.f32.mxu0 0.0
          %920 = vmatmul.mubr.f32.gmra.mrb[0].mxu0 %v760
          %v921 = vpop.f32.mrb[0].mxu0
          %v922 = vadd.f32 0.0, %v921
          %v923 = vpop.f32.mrb[0].mxu0
          %v924 = vadd.f32 0.0, %v923
          %925 = vmatprep.mubr.f32.mxu0 0.0
          %926 = vmatmul.mubr.f32.gmra.mrb[0].mxu0 %v763
          %v927 = vpop.f32.mrb[0].mxu0
          %v928 = vadd.f32 0.0, %v927
          %v929 = vpop.f32.mrb[0].mxu0
          %v930 = vadd.f32 0.0, %v929
          %931 = vdwg.mxu0
          %932 = vmatprep.subr.mxu0 %v776
          %933 = vmatpush1.msra.mxu0 %v774
          %934 = vmatprep.subr.mxu0 0.0
          %935 = vmatpush1.msra.mxu0 0.0
          %936 = vmatprep.subr.mxu0 0.0
          %937 = vmatpush1.msra.mxu0 0.0
          %938 = vmatprep.subr.mxu0 0.0
          %939 = vmatpush1.msra.mxu0 0.0
          %940 = vmatprep.subr.mxu0 0.0
          %941 = vmatpush1.msra.mxu0 0.0
          %942 = vmatprep.subr.mxu0 0.0
          %943 = vmatpush1.msra.mxu0 0.0
          %944 = vmatprep.subr.mxu0 0.0
          %945 = vmatpush1.msra.mxu0 0.0
          %946 = vmatprep.subr.mxu0 0.0
          %947 = vmatpush1.msra.mxu0 0.0
          %948 = vmatprep.subr.mxu0 0.0
          %949 = vmatpush1.msra.mxu0 0.0
          %950 = vmatprep.subr.mxu0 0.0
          %951 = vmatpush1.msra.mxu0 0.0
          %952 = vmatprep.subr.mxu0 0.0
          %953 = vmatpush1.msra.mxu0 0.0
          %954 = vmatprep.subr.mxu0 0.0
          %955 = vmatpush1.msra.mxu0 0.0
          %956 = vmatprep.subr.mxu0 0.0
          %957 = vmatpush1.msra.mxu0 0.0
          %958 = vmatprep.subr.mxu0 0.0
          %959 = vmatpush1.msra.mxu0 0.0
          %960 = vmatprep.subr.mxu0 0.0
          %961 = vmatpush1.msra.mxu0 0.0
          %962 = vmatprep.subr.mxu0 0.0
          %963 = vmatpush1.msra.mxu0 0.0
          %964 = vmatprep.subr.mxu0 0.0
          %965 = vmatpush1.msra.mxu0 0.0
          %966 = vmatprep.subr.mxu0 0.0
          %967 = vmatpush1.msra.mxu0 0.0
          %968 = vmatprep.subr.mxu0 0.0
          %969 = vmatpush1.msra.mxu0 0.0
          %970 = vmatprep.subr.mxu0 0.0
          %971 = vmatpush1.msra.mxu0 0.0
          %972 = vmatprep.subr.mxu0 0.0
          %973 = vmatpush1.msra.mxu0 0.0
          %974 = vmatprep.subr.mxu0 0.0
          %975 = vmatpush1.msra.mxu0 0.0
          %976 = vmatprep.subr.mxu0 0.0
          %977 = vmatpush1.msra.mxu0 0.0
          %978 = vmatprep.subr.mxu0 0.0
          %979 = vmatpush1.msra.mxu0 0.0
          %980 = vmatprep.subr.mxu0 0.0
          %981 = vmatpush1.msra.mxu0 0.0
          %982 = vmatprep.subr.mxu0 0.0
          %983 = vmatpush1.msra.mxu0 0.0
          %984 = vmatprep.subr.mxu0 0.0
          %985 = vmatpush1.msra.mxu0 0.0
          %986 = vmatprep.subr.mxu0 0.0
          %987 = vmatpush1.msra.mxu0 0.0
          %988 = vmatprep.subr.mxu0 0.0
          %989 = vmatpush1.msra.mxu0 0.0
          %990 = vmatprep.subr.mxu0 0.0
          %991 = vmatpush1.msra.mxu0 0.0
          %992 = vmatprep.subr.mxu0 0.0
          %993 = vmatpush1.msra.mxu0 0.0
          %994 = vmatprep.subr.mxu0 0.0
          %995 = vmatpush1.msra.mxu0 0.0
          %996 = vmatprep.mubr.f32.mxu0 0.0
          %997 = vmatmul.mubr.f32.gmra.mrb[0].mxu0 %v760
          %v998 = vpop.f32.mrb[0].mxu0
          %v999 = vadd.f32 0.0, %v998
          %v1000 = vpop.f32.mrb[0].mxu0
          %v1001 = vadd.f32 0.0, %v1000
          %1002 = vmatprep.mubr.f32.mxu0 0.0
          %1003 = vmatmul.mubr.f32.gmra.mrb[0].mxu0 %v763
          %v1004 = vpop.f32.mrb[0].mxu0
          %v1005 = vadd.f32 0.0, %v1004
          %v1006 = vpop.f32.mrb[0].mxu0
          %v1007 = vadd.f32 0.0, %v1006
          %1008 = vdwg.mxu0
          %vm1009 = vcmask 261120
          %v1011 = vsel %vm1009, %v713, 0
          %v1014 = vsel %vm1009, %v718, 0
          %1016 = vmatprep.subr.mxu0 %v437
          %1017 = vmatpush1.msra.mxu0 %v436
          %1018 = vmatprep.subr.mxu0 %v441
          %1019 = vmatpush1.msra.mxu0 %v440
          %1020 = vmatprep.subr.mxu0 %v445
          %1021 = vmatpush1.msra.mxu0 %v444
          %1022 = vmatprep.subr.mxu0 %v449
          %1023 = vmatpush1.msra.mxu0 %v448
          %1024 = vmatprep.subr.mxu0 0.0
          %1025 = vmatpush1.msra.mxu0 0.0
          %1026 = vmatprep.subr.mxu0 0.0
          %1027 = vmatpush1.msra.mxu0 0.0
          %1028 = vmatprep.subr.mxu0 0.0
          %1029 = vmatpush1.msra.mxu0 0.0
          %1030 = vmatprep.subr.mxu0 0.0
          %1031 = vmatpush1.msra.mxu0 0.0
          %1032 = vmatprep.subr.mxu0 0.0
          %1033 = vmatpush1.msra.mxu0 0.0
          %1034 = vmatprep.subr.mxu0 0.0
          %1035 = vmatpush1.msra.mxu0 0.0
          %1036 = vmatprep.subr.mxu0 0.0
          %1037 = vmatpush1.msra.mxu0 0.0
          %1038 = vmatprep.subr.mxu0 0.0
          %1039 = vmatpush1.msra.mxu0 0.0
          %1040 = vmatprep.subr.mxu0 0.0
          %1041 = vmatpush1.msra.mxu0 0.0
          %1042 = vmatprep.subr.mxu0 0.0
          %1043 = vmatpush1.msra.mxu0 0.0
          %1044 = vmatprep.subr.mxu0 0.0
          %1045 = vmatpush1.msra.mxu0 0.0
          %1046 = vmatprep.subr.mxu0 0.0
          %1047 = vmatpush1.msra.mxu0 0.0
          %1048 = vmatprep.subr.mxu0 0.0
          %1049 = vmatpush1.msra.mxu0 0.0
          %1050 = vmatprep.subr.mxu0 0.0
          %1051 = vmatpush1.msra.mxu0 0.0
          %1052 = vmatprep.subr.mxu0 0.0
          %1053 = vmatpush1.msra.mxu0 0.0
          %1054 = vmatprep.subr.mxu0 0.0
          %1055 = vmatpush1.msra.mxu0 0.0
          %1056 = vmatprep.subr.mxu0 0.0
          %1057 = vmatpush1.msra.mxu0 0.0
          %1058 = vmatprep.subr.mxu0 0.0
          %1059 = vmatpush1.msra.mxu0 0.0
          %1060 = vmatprep.subr.mxu0 0.0
          %1061 = vmatpush1.msra.mxu0 0.0
          %1062 = vmatprep.subr.mxu0 0.0
          %1063 = vmatpush1.msra.mxu0 0.0
          %1064 = vmatprep.subr.mxu0 0.0
          %1065 = vmatpush1.msra.mxu0 0.0
          %1066 = vmatprep.subr.mxu0 0.0
          %1067 = vmatpush1.msra.mxu0 0.0
          %1068 = vmatprep.subr.mxu0 0.0
          %1069 = vmatpush1.msra.mxu0 0.0
          %1070 = vmatprep.subr.mxu0 0.0
          %1071 = vmatpush1.msra.mxu0 0.0
          %1072 = vmatprep.subr.mxu0 0.0
          %1073 = vmatpush1.msra.mxu0 0.0
          %1074 = vmatprep.subr.mxu0 0.0
          %1075 = vmatpush1.msra.mxu0 0.0
          %1076 = vmatprep.subr.mxu0 0.0
          %1077 = vmatpush1.msra.mxu0 0.0
          %1078 = vmatprep.subr.mxu0 0.0
          %1079 = vmatpush1.msra.mxu0 0.0
          %1080 = vmatprep.mubr.f32.mxu0 0.0
          %1081 = vmatmul.mubr.f32.gmra.mrb[0].mxu0 %v1011
          %v1082 = vpop.f32.mrb[0].mxu0
          %v1083 = vadd.f32 0.0, %v1082
          %v1084 = vpop.f32.mrb[0].mxu0
          %v1085 = vadd.f32 0.0, %v1084
          %1086 = vmatprep.mubr.f32.mxu0 0.0
          %1087 = vmatmul.mubr.f32.gmra.mrb[0].mxu0 %v1014
          %v1088 = vpop.f32.mrb[0].mxu0
          %v1089 = vadd.f32 0.0, %v1088
          %v1090 = vpop.f32.mrb[0].mxu0
          %v1091 = vadd.f32 0.0, %v1090
          %1092 = vdwg.mxu0
          %1093 = vmatprep.subr.mxu0 %v439
          %1094 = vmatpush1.msra.mxu0 %v438
          %1095 = vmatprep.subr.mxu0 %v443
          %1096 = vmatpush1.msra.mxu0 %v442
          %1097 = vmatprep.subr.mxu0 %v447
          %1098 = vmatpush1.msra.mxu0 %v446
          %1099 = vmatprep.subr.mxu0 %v451
          %1100 = vmatpush1.msra.mxu0 %v450
          %1101 = vmatprep.subr.mxu0 0.0
          %1102 = vmatpush1.msra.mxu0 0.0
          %1103 = vmatprep.subr.mxu0 0.0
          %1104 = vmatpush1.msra.mxu0 0.0
          %1105 = vmatprep.subr.mxu0 0.0
          %1106 = vmatpush1.msra.mxu0 0.0
          %1107 = vmatprep.subr.mxu0 0.0
          %1108 = vmatpush1.msra.mxu0 0.0
          %1109 = vmatprep.subr.mxu0 0.0
          %1110 = vmatpush1.msra.mxu0 0.0
          %1111 = vmatprep.subr.mxu0 0.0
          %1112 = vmatpush1.msra.mxu0 0.0
          %1113 = vmatprep.subr.mxu0 0.0
          %1114 = vmatpush1.msra.mxu0 0.0
          %1115 = vmatprep.subr.mxu0 0.0
          %1116 = vmatpush1.msra.mxu0 0.0
          %1117 = vmatprep.subr.mxu0 0.0
          %1118 = vmatpush1.msra.mxu0 0.0
          %1119 = vmatprep.subr.mxu0 0.0
          %1120 = vmatpush1.msra.mxu0 0.0
          %1121 = vmatprep.subr.mxu0 0.0
          %1122 = vmatpush1.msra.mxu0 0.0
          %1123 = vmatprep.subr.mxu0 0.0
          %1124 = vmatpush1.msra.mxu0 0.0
          %1125 = vmatprep.subr.mxu0 0.0
          %1126 = vmatpush1.msra.mxu0 0.0
          %1127 = vmatprep.subr.mxu0 0.0
          %1128 = vmatpush1.msra.mxu0 0.0
          %1129 = vmatprep.subr.mxu0 0.0
          %1130 = vmatpush1.msra.mxu0 0.0
          %1131 = vmatprep.subr.mxu0 0.0
          %1132 = vmatpush1.msra.mxu0 0.0
          %1133 = vmatprep.subr.mxu0 0.0
          %1134 = vmatpush1.msra.mxu0 0.0
          %1135 = vmatprep.subr.mxu0 0.0
          %1136 = vmatpush1.msra.mxu0 0.0
          %1137 = vmatprep.subr.mxu0 0.0
          %1138 = vmatpush1.msra.mxu0 0.0
          %1139 = vmatprep.subr.mxu0 0.0
          %1140 = vmatpush1.msra.mxu0 0.0
          %1141 = vmatprep.subr.mxu0 0.0
          %1142 = vmatpush1.msra.mxu0 0.0
          %1143 = vmatprep.subr.mxu0 0.0
          %1144 = vmatpush1.msra.mxu0 0.0
          %1145 = vmatprep.subr.mxu0 0.0
          %1146 = vmatpush1.msra.mxu0 0.0
          %1147 = vmatprep.subr.mxu0 0.0
          %1148 = vmatpush1.msra.mxu0 0.0
          %1149 = vmatprep.subr.mxu0 0.0
          %1150 = vmatpush1.msra.mxu0 0.0
          %1151 = vmatprep.subr.mxu0 0.0
          %1152 = vmatpush1.msra.mxu0 0.0
          %1153 = vmatprep.subr.mxu0 0.0
          %1154 = vmatpush1.msra.mxu0 0.0
          %1155 = vmatprep.subr.mxu0 0.0
          %1156 = vmatpush1.msra.mxu0 0.0
          %1157 = vmatprep.mubr.f32.mxu0 0.0
          %1158 = vmatmul.mubr.f32.gmra.mrb[0].mxu0 %v1011
          %v1159 = vpop.f32.mrb[0].mxu0
          %v1160 = vadd.f32 0.0, %v1159
          %v1161 = vpop.f32.mrb[0].mxu0
          %v1162 = vadd.f32 0.0, %v1161
          %1163 = vmatprep.mubr.f32.mxu0 0.0
          %1164 = vmatmul.mubr.f32.gmra.mrb[0].mxu0 %v1014
          %v1165 = vpop.f32.mrb[0].mxu0
          %v1166 = vadd.f32 0.0, %v1165
          %v1167 = vpop.f32.mrb[0].mxu0
          %v1168 = vadd.f32 0.0, %v1167
          %1169 = vdwg.mxu0
          %v1172 = vcombine.high %v414, %v414
          %v1174 = vunpack.c.l.s4 1983009808
          %v1175 = vunpack.c.0.s8 %v1174
          %v1176 = vlaneseq
          %v1177 = vshrl.u32 %v1176, 7
          %v1178 = vsub.s32 %v1175, %v1177
          %v1179 = vrot.slane %v414, %v1178
          %v1181 = vunpack.c.l.s4 1983009808
          %v1182 = vunpack.c.0.s8 %v1181
          %v1183 = vlaneseq
          %v1184 = vshrl.u32 %v1183, 7
          %v1185 = vsub.s32 %v1182, %v1184
          %v1186 = vrot.slane %v1172, %v1185
          %v1187 = vcombine.high %v1179, %v1179
          %v1188 = vcombine.high %v1186, %v1186
          %v1190 = vunpack.c.l.s4 1983009808
          %v1191 = vunpack.c.0.s8 %v1190
          %v1192 = vlaneseq
          %v1193 = vshrl.u32 %v1192, 7
          %v1194 = vsub.s32 %v1191, %v1193
          %v1195 = vrot.slane %v415, %v1194
          %v1196 = vcombine.high %v1195, %v1195
          %v1198 = vsel %vm758, %v608, 0
          %v1201 = vsel %vm758, %v613, 0
          %v1203 = vsel %vm765, %v1179, 0
          %v1205 = vsel %vm765, %v1187, 0
          %v1207 = vsel %vm765, %v1186, 0
          %v1209 = vsel %vm765, %v1188, 0
          %v1211 = vsel %vm765, %v1195, 0
          %v1213 = vsel %vm765, %v1196, 0
          %1215 = vmatprep.subr.mxu0 %v1205
          %1216 = vmatpush1.msra.mxu0 %v1203
          %1217 = vmatprep.subr.mxu0 0.0
          %1218 = vmatpush1.msra.mxu0 0.0
          %1219 = vmatprep.subr.mxu0 0.0
          %1220 = vmatpush1.msra.mxu0 0.0
          %1221 = vmatprep.subr.mxu0 0.0
          %1222 = vmatpush1.msra.mxu0 0.0
          %1223 = vmatprep.subr.mxu0 0.0
          %1224 = vmatpush1.msra.mxu0 0.0
          %1225 = vmatprep.subr.mxu0 0.0
          %1226 = vmatpush1.msra.mxu0 0.0
          %1227 = vmatprep.subr.mxu0 0.0
          %1228 = vmatpush1.msra.mxu0 0.0
          %1229 = vmatprep.subr.mxu0 0.0
          %1230 = vmatpush1.msra.mxu0 0.0
          %1231 = vmatprep.subr.mxu0 0.0
          %1232 = vmatpush1.msra.mxu0 0.0
          %1233 = vmatprep.subr.mxu0 0.0
          %1234 = vmatpush1.msra.mxu0 0.0
          %1235 = vmatprep.subr.mxu0 0.0
          %1236 = vmatpush1.msra.mxu0 0.0
          %1237 = vmatprep.subr.mxu0 0.0
          %1238 = vmatpush1.msra.mxu0 0.0
          %1239 = vmatprep.subr.mxu0 0.0
          %1240 = vmatpush1.msra.mxu0 0.0
          %1241 = vmatprep.subr.mxu0 0.0
          %1242 = vmatpush1.msra.mxu0 0.0
          %1243 = vmatprep.subr.mxu0 0.0
          %1244 = vmatpush1.msra.mxu0 0.0
          %1245 = vmatprep.subr.mxu0 0.0
          %1246 = vmatpush1.msra.mxu0 0.0
          %1247 = vmatprep.subr.mxu0 0.0
          %1248 = vmatpush1.msra.mxu0 0.0
          %1249 = vmatprep.subr.mxu0 0.0
          %1250 = vmatpush1.msra.mxu0 0.0
          %1251 = vmatprep.subr.mxu0 0.0
          %1252 = vmatpush1.msra.mxu0 0.0
          %1253 = vmatprep.subr.mxu0 0.0
          %1254 = vmatpush1.msra.mxu0 0.0
          %1255 = vmatprep.subr.mxu0 0.0
          %1256 = vmatpush1.msra.mxu0 0.0
          %1257 = vmatprep.subr.mxu0 0.0
          %1258 = vmatpush1.msra.mxu0 0.0
          %1259 = vmatprep.subr.mxu0 0.0
          %1260 = vmatpush1.msra.mxu0 0.0
          %1261 = vmatprep.subr.mxu0 0.0
          %1262 = vmatpush1.msra.mxu0 0.0
          %1263 = vmatprep.subr.mxu0 0.0
          %1264 = vmatpush1.msra.mxu0 0.0
          %1265 = vmatprep.subr.mxu0 0.0
          %1266 = vmatpush1.msra.mxu0 0.0
          %1267 = vmatprep.subr.mxu0 0.0
          %1268 = vmatpush1.msra.mxu0 0.0
          %1269 = vmatprep.subr.mxu0 0.0
          %1270 = vmatpush1.msra.mxu0 0.0
          %1271 = vmatprep.subr.mxu0 0.0
          %1272 = vmatpush1.msra.mxu0 0.0
          %1273 = vmatprep.subr.mxu0 0.0
          %1274 = vmatpush1.msra.mxu0 0.0
          %1275 = vmatprep.subr.mxu0 0.0
          %1276 = vmatpush1.msra.mxu0 0.0
          %1277 = vmatprep.subr.mxu0 0.0
          %1278 = vmatpush1.msra.mxu0 0.0
          %1279 = vmatprep.mubr.f32.mxu0 0.0
          %1280 = vmatmul.mubr.f32.gmra.mrb[0].mxu0 %v1198
          %v1281 = vpop.f32.mrb[0].mxu0
          %v1282 = vadd.f32 %v845, %v1281
          %v1283 = vpop.f32.mrb[0].mxu0
          %v1284 = vadd.f32 %v847, %v1283
          %1285 = vmatprep.mubr.f32.mxu0 0.0
          %1286 = vmatmul.mubr.f32.gmra.mrb[0].mxu0 %v1201
          %v1287 = vpop.f32.mrb[0].mxu0
          %v1288 = vadd.f32 %v851, %v1287
          %v1289 = vpop.f32.mrb[0].mxu0
          %v1290 = vadd.f32 %v853, %v1289
          %1291 = vdwg.mxu0
          %1292 = vmatprep.subr.mxu0 %v1209
          %1293 = vmatpush1.msra.mxu0 %v1207
          %1294 = vmatprep.subr.mxu0 0.0
          %1295 = vmatpush1.msra.mxu0 0.0
          %1296 = vmatprep.subr.mxu0 0.0
          %1297 = vmatpush1.msra.mxu0 0.0
          %1298 = vmatprep.subr.mxu0 0.0
          %1299 = vmatpush1.msra.mxu0 0.0
          %1300 = vmatprep.subr.mxu0 0.0
          %1301 = vmatpush1.msra.mxu0 0.0
          %1302 = vmatprep.subr.mxu0 0.0
          %1303 = vmatpush1.msra.mxu0 0.0
          %1304 = vmatprep.subr.mxu0 0.0
          %1305 = vmatpush1.msra.mxu0 0.0
          %1306 = vmatprep.subr.mxu0 0.0
          %1307 = vmatpush1.msra.mxu0 0.0
          %1308 = vmatprep.subr.mxu0 0.0
          %1309 = vmatpush1.msra.mxu0 0.0
          %1310 = vmatprep.subr.mxu0 0.0
          %1311 = vmatpush1.msra.mxu0 0.0
          %1312 = vmatprep.subr.mxu0 0.0
          %1313 = vmatpush1.msra.mxu0 0.0
          %1314 = vmatprep.subr.mxu0 0.0
          %1315 = vmatpush1.msra.mxu0 0.0
          %1316 = vmatprep.subr.mxu0 0.0
          %1317 = vmatpush1.msra.mxu0 0.0
          %1318 = vmatprep.subr.mxu0 0.0
          %1319 = vmatpush1.msra.mxu0 0.0
          %1320 = vmatprep.subr.mxu0 0.0
          %1321 = vmatpush1.msra.mxu0 0.0
          %1322 = vmatprep.subr.mxu0 0.0
          %1323 = vmatpush1.msra.mxu0 0.0
          %1324 = vmatprep.subr.mxu0 0.0
          %1325 = vmatpush1.msra.mxu0 0.0
          %1326 = vmatprep.subr.mxu0 0.0
          %1327 = vmatpush1.msra.mxu0 0.0
          %1328 = vmatprep.subr.mxu0 0.0
          %1329 = vmatpush1.msra.mxu0 0.0
          %1330 = vmatprep.subr.mxu0 0.0
          %1331 = vmatpush1.msra.mxu0 0.0
          %1332 = vmatprep.subr.mxu0 0.0
          %1333 = vmatpush1.msra.mxu0 0.0
          %1334 = vmatprep.subr.mxu0 0.0
          %1335 = vmatpush1.msra.mxu0 0.0
          %1336 = vmatprep.subr.mxu0 0.0
          %1337 = vmatpush1.msra.mxu0 0.0
          %1338 = vmatprep.subr.mxu0 0.0
          %1339 = vmatpush1.msra.mxu0 0.0
          %1340 = vmatprep.subr.mxu0 0.0
          %1341 = vmatpush1.msra.mxu0 0.0
          %1342 = vmatprep.subr.mxu0 0.0
          %1343 = vmatpush1.msra.mxu0 0.0
          %1344 = vmatprep.subr.mxu0 0.0
          %1345 = vmatpush1.msra.mxu0 0.0
          %1346 = vmatprep.subr.mxu0 0.0
          %1347 = vmatpush1.msra.mxu0 0.0
          %1348 = vmatprep.subr.mxu0 0.0
          %1349 = vmatpush1.msra.mxu0 0.0
          %1350 = vmatprep.subr.mxu0 0.0
          %1351 = vmatpush1.msra.mxu0 0.0
          %1352 = vmatprep.subr.mxu0 0.0
          %1353 = vmatpush1.msra.mxu0 0.0
          %1354 = vmatprep.subr.mxu0 0.0
          %1355 = vmatpush1.msra.mxu0 0.0
          %1356 = vmatprep.mubr.f32.mxu0 0.0
          %1357 = vmatmul.mubr.f32.gmra.mrb[0].mxu0 %v1198
          %v1358 = vpop.f32.mrb[0].mxu0
          %v1359 = vadd.f32 %v922, %v1358
          %v1360 = vpop.f32.mrb[0].mxu0
          %v1361 = vadd.f32 %v924, %v1360
          %1362 = vmatprep.mubr.f32.mxu0 0.0
          %1363 = vmatmul.mubr.f32.gmra.mrb[0].mxu0 %v1201
          %v1364 = vpop.f32.mrb[0].mxu0
          %v1365 = vadd.f32 %v928, %v1364
          %v1366 = vpop.f32.mrb[0].mxu0
          %v1367 = vadd.f32 %v930, %v1366
          %1368 = vdwg.mxu0
          %1369 = vmatprep.subr.mxu0 %v1213
          %1370 = vmatpush1.msra.mxu0 %v1211
          %1371 = vmatprep.subr.mxu0 0.0
          %1372 = vmatpush1.msra.mxu0 0.0
          %1373 = vmatprep.subr.mxu0 0.0
          %1374 = vmatpush1.msra.mxu0 0.0
          %1375 = vmatprep.subr.mxu0 0.0
          %1376 = vmatpush1.msra.mxu0 0.0
          %1377 = vmatprep.subr.mxu0 0.0
          %1378 = vmatpush1.msra.mxu0 0.0
          %1379 = vmatprep.subr.mxu0 0.0
          %1380 = vmatpush1.msra.mxu0 0.0
          %1381 = vmatprep.subr.mxu0 0.0
          %1382 = vmatpush1.msra.mxu0 0.0
          %1383 = vmatprep.subr.mxu0 0.0
          %1384 = vmatpush1.msra.mxu0 0.0
          %1385 = vmatprep.subr.mxu0 0.0
          %1386 = vmatpush1.msra.mxu0 0.0
          %1387 = vmatprep.subr.mxu0 0.0
          %1388 = vmatpush1.msra.mxu0 0.0
          %1389 = vmatprep.subr.mxu0 0.0
          %1390 = vmatpush1.msra.mxu0 0.0
          %1391 = vmatprep.subr.mxu0 0.0
          %1392 = vmatpush1.msra.mxu0 0.0
          %1393 = vmatprep.subr.mxu0 0.0
          %1394 = vmatpush1.msra.mxu0 0.0
          %1395 = vmatprep.subr.mxu0 0.0
          %1396 = vmatpush1.msra.mxu0 0.0
          %1397 = vmatprep.subr.mxu0 0.0
          %1398 = vmatpush1.msra.mxu0 0.0
          %1399 = vmatprep.subr.mxu0 0.0
          %1400 = vmatpush1.msra.mxu0 0.0
          %1401 = vmatprep.subr.mxu0 0.0
          %1402 = vmatpush1.msra.mxu0 0.0
          %1403 = vmatprep.subr.mxu0 0.0
          %1404 = vmatpush1.msra.mxu0 0.0
          %1405 = vmatprep.subr.mxu0 0.0
          %1406 = vmatpush1.msra.mxu0 0.0
          %1407 = vmatprep.subr.mxu0 0.0
          %1408 = vmatpush1.msra.mxu0 0.0
          %1409 = vmatprep.subr.mxu0 0.0
          %1410 = vmatpush1.msra.mxu0 0.0
          %1411 = vmatprep.subr.mxu0 0.0
          %1412 = vmatpush1.msra.mxu0 0.0
          %1413 = vmatprep.subr.mxu0 0.0
          %1414 = vmatpush1.msra.mxu0 0.0
          %1415 = vmatprep.subr.mxu0 0.0
          %1416 = vmatpush1.msra.mxu0 0.0
          %1417 = vmatprep.subr.mxu0 0.0
          %1418 = vmatpush1.msra.mxu0 0.0
          %1419 = vmatprep.subr.mxu0 0.0
          %1420 = vmatpush1.msra.mxu0 0.0
          %1421 = vmatprep.subr.mxu0 0.0
          %1422 = vmatpush1.msra.mxu0 0.0
          %1423 = vmatprep.subr.mxu0 0.0
          %1424 = vmatpush1.msra.mxu0 0.0
          %1425 = vmatprep.subr.mxu0 0.0
          %1426 = vmatpush1.msra.mxu0 0.0
          %1427 = vmatprep.subr.mxu0 0.0
          %1428 = vmatpush1.msra.mxu0 0.0
          %1429 = vmatprep.subr.mxu0 0.0
          %1430 = vmatpush1.msra.mxu0 0.0
          %1431 = vmatprep.subr.mxu0 0.0
          %1432 = vmatpush1.msra.mxu0 0.0
          %1433 = vmatprep.mubr.f32.mxu0 0.0
          %1434 = vmatmul.mubr.f32.gmra.mrb[0].mxu0 %v1198
          %v1435 = vpop.f32.mrb[0].mxu0
          %v1436 = vadd.f32 %v999, %v1435
          %v1437 = vpop.f32.mrb[0].mxu0
          %v1438 = vadd.f32 %v1001, %v1437
          %1439 = vmatprep.mubr.f32.mxu0 0.0
          %1440 = vmatmul.mubr.f32.gmra.mrb[0].mxu0 %v1201
          %v1441 = vpop.f32.mrb[0].mxu0
          %v1442 = vadd.f32 %v1005, %v1441
          %v1443 = vpop.f32.mrb[0].mxu0
          %v1444 = vadd.f32 %v1007, %v1443
          %1445 = vdwg.mxu0
          %v1447 = vsel %vm1009, %v703, 0
          %v1450 = vsel %vm1009, %v708, 0
          %1452 = vmatprep.subr.mxu0 %v421
          %1453 = vmatpush1.msra.mxu0 %v420
          %1454 = vmatprep.subr.mxu0 %v425
          %1455 = vmatpush1.msra.mxu0 %v424
          %1456 = vmatprep.subr.mxu0 %v429
          %1457 = vmatpush1.msra.mxu0 %v428
          %1458 = vmatprep.subr.mxu0 %v433
          %1459 = vmatpush1.msra.mxu0 %v432
          %1460 = vmatprep.subr.mxu0 0.0
          %1461 = vmatpush1.msra.mxu0 0.0
          %1462 = vmatprep.subr.mxu0 0.0
          %1463 = vmatpush1.msra.mxu0 0.0
          %1464 = vmatprep.subr.mxu0 0.0
          %1465 = vmatpush1.msra.mxu0 0.0
          %1466 = vmatprep.subr.mxu0 0.0
          %1467 = vmatpush1.msra.mxu0 0.0
          %1468 = vmatprep.subr.mxu0 0.0
          %1469 = vmatpush1.msra.mxu0 0.0
          %1470 = vmatprep.subr.mxu0 0.0
          %1471 = vmatpush1.msra.mxu0 0.0
          %1472 = vmatprep.subr.mxu0 0.0
          %1473 = vmatpush1.msra.mxu0 0.0
          %1474 = vmatprep.subr.mxu0 0.0
          %1475 = vmatpush1.msra.mxu0 0.0
          %1476 = vmatprep.subr.mxu0 0.0
          %1477 = vmatpush1.msra.mxu0 0.0
          %1478 = vmatprep.subr.mxu0 0.0
          %1479 = vmatpush1.msra.mxu0 0.0
          %1480 = vmatprep.subr.mxu0 0.0
          %1481 = vmatpush1.msra.mxu0 0.0
          %1482 = vmatprep.subr.mxu0 0.0
          %1483 = vmatpush1.msra.mxu0 0.0
          %1484 = vmatprep.subr.mxu0 0.0
          %1485 = vmatpush1.msra.mxu0 0.0
          %1486 = vmatprep.subr.mxu0 0.0
          %1487 = vmatpush1.msra.mxu0 0.0
          %1488 = vmatprep.subr.mxu0 0.0
          %1489 = vmatpush1.msra.mxu0 0.0
          %1490 = vmatprep.subr.mxu0 0.0
          %1491 = vmatpush1.msra.mxu0 0.0
          %1492 = vmatprep.subr.mxu0 0.0
          %1493 = vmatpush1.msra.mxu0 0.0
          %1494 = vmatprep.subr.mxu0 0.0
          %1495 = vmatpush1.msra.mxu0 0.0
          %1496 = vmatprep.subr.mxu0 0.0
          %1497 = vmatpush1.msra.mxu0 0.0
          %1498 = vmatprep.subr.mxu0 0.0
          %1499 = vmatpush1.msra.mxu0 0.0
          %1500 = vmatprep.subr.mxu0 0.0
          %1501 = vmatpush1.msra.mxu0 0.0
          %1502 = vmatprep.subr.mxu0 0.0
          %1503 = vmatpush1.msra.mxu0 0.0
          %1504 = vmatprep.subr.mxu0 0.0
          %1505 = vmatpush1.msra.mxu0 0.0
          %1506 = vmatprep.subr.mxu0 0.0
          %1507 = vmatpush1.msra.mxu0 0.0
          %1508 = vmatprep.subr.mxu0 0.0
          %1509 = vmatpush1.msra.mxu0 0.0
          %1510 = vmatprep.subr.mxu0 0.0
          %1511 = vmatpush1.msra.mxu0 0.0
          %1512 = vmatprep.subr.mxu0 0.0
          %1513 = vmatpush1.msra.mxu0 0.0
          %1514 = vmatprep.subr.mxu0 0.0
          %1515 = vmatpush1.msra.mxu0 0.0
          %1516 = vmatprep.mubr.f32.mxu0 0.0
          %1517 = vmatmul.mubr.f32.gmra.mrb[0].mxu0 %v1447
          %v1518 = vpop.f32.mrb[0].mxu0
          %v1519 = vadd.f32 %v1083, %v1518
          %v1520 = vpop.f32.mrb[0].mxu0
          %v1521 = vadd.f32 %v1085, %v1520
          %1522 = vmatprep.mubr.f32.mxu0 0.0
          %1523 = vmatmul.mubr.f32.gmra.mrb[0].mxu0 %v1450
          %v1524 = vpop.f32.mrb[0].mxu0
          %v1525 = vadd.f32 %v1089, %v1524
          %v1526 = vpop.f32.mrb[0].mxu0
          %v1527 = vadd.f32 %v1091, %v1526
          %1528 = vdwg.mxu0
          %1529 = vmatprep.subr.mxu0 %v423
          %1530 = vmatpush1.msra.mxu0 %v422
          %1531 = vmatprep.subr.mxu0 %v427
          %1532 = vmatpush1.msra.mxu0 %v426
          %1533 = vmatprep.subr.mxu0 %v431
          %1534 = vmatpush1.msra.mxu0 %v430
          %1535 = vmatprep.subr.mxu0 %v435
          %1536 = vmatpush1.msra.mxu0 %v434
          %1537 = vmatprep.subr.mxu0 0.0
          %1538 = vmatpush1.msra.mxu0 0.0
          %1539 = vmatprep.subr.mxu0 0.0
          %1540 = vmatpush1.msra.mxu0 0.0
          %1541 = vmatprep.subr.mxu0 0.0
          %1542 = vmatpush1.msra.mxu0 0.0
          %1543 = vmatprep.subr.mxu0 0.0
          %1544 = vmatpush1.msra.mxu0 0.0
          %1545 = vmatprep.subr.mxu0 0.0
          %1546 = vmatpush1.msra.mxu0 0.0
          %1547 = vmatprep.subr.mxu0 0.0
          %1548 = vmatpush1.msra.mxu0 0.0
          %1549 = vmatprep.subr.mxu0 0.0
          %1550 = vmatpush1.msra.mxu0 0.0
          %1551 = vmatprep.subr.mxu0 0.0
          %1552 = vmatpush1.msra.mxu0 0.0
          %1553 = vmatprep.subr.mxu0 0.0
          %1554 = vmatpush1.msra.mxu0 0.0
          %1555 = vmatprep.subr.mxu0 0.0
          %1556 = vmatpush1.msra.mxu0 0.0
          %1557 = vmatprep.subr.mxu0 0.0
          %1558 = vmatpush1.msra.mxu0 0.0
          %1559 = vmatprep.subr.mxu0 0.0
          %1560 = vmatpush1.msra.mxu0 0.0
          %1561 = vmatprep.subr.mxu0 0.0
          %1562 = vmatpush1.msra.mxu0 0.0
          %1563 = vmatprep.subr.mxu0 0.0
          %1564 = vmatpush1.msra.mxu0 0.0
          %1565 = vmatprep.subr.mxu0 0.0
          %1566 = vmatpush1.msra.mxu0 0.0
          %1567 = vmatprep.subr.mxu0 0.0
          %1568 = vmatpush1.msra.mxu0 0.0
          %1569 = vmatprep.subr.mxu0 0.0
          %1570 = vmatpush1.msra.mxu0 0.0
          %1571 = vmatprep.subr.mxu0 0.0
          %1572 = vmatpush1.msra.mxu0 0.0
          %1573 = vmatprep.subr.mxu0 0.0
          %1574 = vmatpush1.msra.mxu0 0.0
          %1575 = vmatprep.subr.mxu0 0.0
          %1576 = vmatpush1.msra.mxu0 0.0
          %1577 = vmatprep.subr.mxu0 0.0
          %1578 = vmatpush1.msra.mxu0 0.0
          %1579 = vmatprep.subr.mxu0 0.0
          %1580 = vmatpush1.msra.mxu0 0.0
          %1581 = vmatprep.subr.mxu0 0.0
          %1582 = vmatpush1.msra.mxu0 0.0
          %1583 = vmatprep.subr.mxu0 0.0
          %1584 = vmatpush1.msra.mxu0 0.0
          %1585 = vmatprep.subr.mxu0 0.0
          %1586 = vmatpush1.msra.mxu0 0.0
          %1587 = vmatprep.subr.mxu0 0.0
          %1588 = vmatpush1.msra.mxu0 0.0
          %1589 = vmatprep.subr.mxu0 0.0
          %1590 = vmatpush1.msra.mxu0 0.0
          %1591 = vmatprep.subr.mxu0 0.0
          %1592 = vmatpush1.msra.mxu0 0.0
          %1593 = vmatprep.mubr.f32.mxu0 0.0
          %1594 = vmatmul.mubr.f32.gmra.mrb[0].mxu0 %v1447
          %v1595 = vpop.f32.mrb[0].mxu0
          %v1596 = vadd.f32 %v1160, %v1595
          %v1597 = vpop.f32.mrb[0].mxu0
          %v1598 = vadd.f32 %v1162, %v1597
          %1599 = vmatprep.mubr.f32.mxu0 0.0
          %1600 = vmatmul.mubr.f32.gmra.mrb[0].mxu0 %v1450
          %v1601 = vpop.f32.mrb[0].mxu0
          %v1602 = vadd.f32 %v1166, %v1601
          %v1603 = vpop.f32.mrb[0].mxu0
          %v1604 = vadd.f32 %v1168, %v1603
          %1605 = vdwg.mxu0
          %v1608 = vcombine.high %v418, %v418
          %v1610 = vunpack.c.l.s4 1983009808
          %v1611 = vunpack.c.0.s8 %v1610
          %v1612 = vlaneseq
          %v1613 = vshrl.u32 %v1612, 7
          %v1614 = vsub.s32 %v1611, %v1613
          %v1615 = vrot.slane %v418, %v1614
          %v1617 = vunpack.c.l.s4 1983009808
          %v1618 = vunpack.c.0.s8 %v1617
          %v1619 = vlaneseq
          %v1620 = vshrl.u32 %v1619, 7
          %v1621 = vsub.s32 %v1618, %v1620
          %v1622 = vrot.slane %v1608, %v1621
          %v1623 = vcombine.high %v1615, %v1615
          %v1624 = vcombine.high %v1622, %v1622
          %v1626 = vunpack.c.l.s4 1983009808
          %v1627 = vunpack.c.0.s8 %v1626
          %v1628 = vlaneseq
          %v1629 = vshrl.u32 %v1628, 7
          %v1630 = vsub.s32 %v1627, %v1629
          %v1631 = vrot.slane %v419, %v1630
          %v1632 = vcombine.high %v1631, %v1631
          %v1634 = vsel %vm758, %v628, 0
          %v1637 = vsel %vm758, %v633, 0
          %v1639 = vsel %vm765, %v1615, 0
          %v1641 = vsel %vm765, %v1623, 0
          %v1643 = vsel %vm765, %v1622, 0
          %v1645 = vsel %vm765, %v1624, 0
          %v1647 = vsel %vm765, %v1631, 0
          %v1649 = vsel %vm765, %v1632, 0
          %1651 = vmatprep.subr.mxu0 %v1641
          %1652 = vmatpush1.msra.mxu0 %v1639
          %1653 = vmatprep.subr.mxu0 0.0
          %1654 = vmatpush1.msra.mxu0 0.0
          %1655 = vmatprep.subr.mxu0 0.0
          %1656 = vmatpush1.msra.mxu0 0.0
          %1657 = vmatprep.subr.mxu0 0.0
          %1658 = vmatpush1.msra.mxu0 0.0
          %1659 = vmatprep.subr.mxu0 0.0
          %1660 = vmatpush1.msra.mxu0 0.0
          %1661 = vmatprep.subr.mxu0 0.0
          %1662 = vmatpush1.msra.mxu0 0.0
          %1663 = vmatprep.subr.mxu0 0.0
          %1664 = vmatpush1.msra.mxu0 0.0
          %1665 = vmatprep.subr.mxu0 0.0
          %1666 = vmatpush1.msra.mxu0 0.0
          %1667 = vmatprep.subr.mxu0 0.0
          %1668 = vmatpush1.msra.mxu0 0.0
          %1669 = vmatprep.subr.mxu0 0.0
          %1670 = vmatpush1.msra.mxu0 0.0
          %1671 = vmatprep.subr.mxu0 0.0
          %1672 = vmatpush1.msra.mxu0 0.0
          %1673 = vmatprep.subr.mxu0 0.0
          %1674 = vmatpush1.msra.mxu0 0.0
          %1675 = vmatprep.subr.mxu0 0.0
          %1676 = vmatpush1.msra.mxu0 0.0
          %1677 = vmatprep.subr.mxu0 0.0
          %1678 = vmatpush1.msra.mxu0 0.0
          %1679 = vmatprep.subr.mxu0 0.0
          %1680 = vmatpush1.msra.mxu0 0.0
          %1681 = vmatprep.subr.mxu0 0.0
          %1682 = vmatpush1.msra.mxu0 0.0
          %1683 = vmatprep.subr.mxu0 0.0
          %1684 = vmatpush1.msra.mxu0 0.0
          %1685 = vmatprep.subr.mxu0 0.0
          %1686 = vmatpush1.msra.mxu0 0.0
          %1687 = vmatprep.subr.mxu0 0.0
          %1688 = vmatpush1.msra.mxu0 0.0
          %1689 = vmatprep.subr.mxu0 0.0
          %1690 = vmatpush1.msra.mxu0 0.0
          %1691 = vmatprep.subr.mxu0 0.0
          %1692 = vmatpush1.msra.mxu0 0.0
          %1693 = vmatprep.subr.mxu0 0.0
          %1694 = vmatpush1.msra.mxu0 0.0
          %1695 = vmatprep.subr.mxu0 0.0
          %1696 = vmatpush1.msra.mxu0 0.0
          %1697 = vmatprep.subr.mxu0 0.0
          %1698 = vmatpush1.msra.mxu0 0.0
          %1699 = vmatprep.subr.mxu0 0.0
          %1700 = vmatpush1.msra.mxu0 0.0
          %1701 = vmatprep.subr.mxu0 0.0
          %1702 = vmatpush1.msra.mxu0 0.0
          %1703 = vmatprep.subr.mxu0 0.0
          %1704 = vmatpush1.msra.mxu0 0.0
          %1705 = vmatprep.subr.mxu0 0.0
          %1706 = vmatpush1.msra.mxu0 0.0
          %1707 = vmatprep.subr.mxu0 0.0
          %1708 = vmatpush1.msra.mxu0 0.0
          %1709 = vmatprep.subr.mxu0 0.0
          %1710 = vmatpush1.msra.mxu0 0.0
          %1711 = vmatprep.subr.mxu0 0.0
          %1712 = vmatpush1.msra.mxu0 0.0
          %1713 = vmatprep.subr.mxu0 0.0
          %1714 = vmatpush1.msra.mxu0 0.0
          %1715 = vmatprep.mubr.f32.mxu0 0.0
          %1716 = vmatmul.mubr.f32.gmra.mrb[0].mxu0 %v1634
          %v1717 = vpop.f32.mrb[0].mxu0
          %v1718 = vadd.f32 0.0, %v1717
          %v1719 = vpop.f32.mrb[0].mxu0
          %v1720 = vadd.f32 0.0, %v1719
          %1721 = vmatprep.mubr.f32.mxu0 0.0
          %1722 = vmatmul.mubr.f32.gmra.mrb[0].mxu0 %v1637
          %v1723 = vpop.f32.mrb[0].mxu0
          %v1724 = vadd.f32 0.0, %v1723
          %v1725 = vpop.f32.mrb[0].mxu0
          %v1726 = vadd.f32 0.0, %v1725
          %1727 = vdwg.mxu0
          %1728 = vmatprep.subr.mxu0 %v1645
          %1729 = vmatpush1.msra.mxu0 %v1643
          %1730 = vmatprep.subr.mxu0 0.0
          %1731 = vmatpush1.msra.mxu0 0.0
          %1732 = vmatprep.subr.mxu0 0.0
          %1733 = vmatpush1.msra.mxu0 0.0
          %1734 = vmatprep.subr.mxu0 0.0
          %1735 = vmatpush1.msra.mxu0 0.0
          %1736 = vmatprep.subr.mxu0 0.0
          %1737 = vmatpush1.msra.mxu0 0.0
          %1738 = vmatprep.subr.mxu0 0.0
          %1739 = vmatpush1.msra.mxu0 0.0
          %1740 = vmatprep.subr.mxu0 0.0
          %1741 = vmatpush1.msra.mxu0 0.0
          %1742 = vmatprep.subr.mxu0 0.0
          %1743 = vmatpush1.msra.mxu0 0.0
          %1744 = vmatprep.subr.mxu0 0.0
          %1745 = vmatpush1.msra.mxu0 0.0
          %1746 = vmatprep.subr.mxu0 0.0
          %1747 = vmatpush1.msra.mxu0 0.0
          %1748 = vmatprep.subr.mxu0 0.0
          %1749 = vmatpush1.msra.mxu0 0.0
          %1750 = vmatprep.subr.mxu0 0.0
          %1751 = vmatpush1.msra.mxu0 0.0
          %1752 = vmatprep.subr.mxu0 0.0
          %1753 = vmatpush1.msra.mxu0 0.0
          %1754 = vmatprep.subr.mxu0 0.0
          %1755 = vmatpush1.msra.mxu0 0.0
          %1756 = vmatprep.subr.mxu0 0.0
          %1757 = vmatpush1.msra.mxu0 0.0
          %1758 = vmatprep.subr.mxu0 0.0
          %1759 = vmatpush1.msra.mxu0 0.0
          %1760 = vmatprep.subr.mxu0 0.0
          %1761 = vmatpush1.msra.mxu0 0.0
          %1762 = vmatprep.subr.mxu0 0.0
          %1763 = vmatpush1.msra.mxu0 0.0
          %1764 = vmatprep.subr.mxu0 0.0
          %1765 = vmatpush1.msra.mxu0 0.0
          %1766 = vmatprep.subr.mxu0 0.0
          %1767 = vmatpush1.msra.mxu0 0.0
          %1768 = vmatprep.subr.mxu0 0.0
          %1769 = vmatpush1.msra.mxu0 0.0
          %1770 = vmatprep.subr.mxu0 0.0
          %1771 = vmatpush1.msra.mxu0 0.0
          %1772 = vmatprep.subr.mxu0 0.0
          %1773 = vmatpush1.msra.mxu0 0.0
          %1774 = vmatprep.subr.mxu0 0.0
          %1775 = vmatpush1.msra.mxu0 0.0
          %1776 = vmatprep.subr.mxu0 0.0
          %1777 = vmatpush1.msra.mxu0 0.0
          %1778 = vmatprep.subr.mxu0 0.0
          %1779 = vmatpush1.msra.mxu0 0.0
          %1780 = vmatprep.subr.mxu0 0.0
          %1781 = vmatpush1.msra.mxu0 0.0
          %1782 = vmatprep.subr.mxu0 0.0
          %1783 = vmatpush1.msra.mxu0 0.0
          %1784 = vmatprep.subr.mxu0 0.0
          %1785 = vmatpush1.msra.mxu0 0.0
          %1786 = vmatprep.subr.mxu0 0.0
          %1787 = vmatpush1.msra.mxu0 0.0
          %1788 = vmatprep.subr.mxu0 0.0
          %1789 = vmatpush1.msra.mxu0 0.0
          %1790 = vmatprep.subr.mxu0 0.0
          %1791 = vmatpush1.msra.mxu0 0.0
          %1792 = vmatprep.mubr.f32.mxu0 0.0
          %1793 = vmatmul.mubr.f32.gmra.mrb[0].mxu0 %v1634
          %v1794 = vpop.f32.mrb[0].mxu0
          %v1795 = vadd.f32 0.0, %v1794
          %v1796 = vpop.f32.mrb[0].mxu0
          %v1797 = vadd.f32 0.0, %v1796
          %1798 = vmatprep.mubr.f32.mxu0 0.0
          %1799 = vmatmul.mubr.f32.gmra.mrb[0].mxu0 %v1637
          %v1800 = vpop.f32.mrb[0].mxu0
          %v1801 = vadd.f32 0.0, %v1800
          %v1802 = vpop.f32.mrb[0].mxu0
          %v1803 = vadd.f32 0.0, %v1802
          %1804 = vdwg.mxu0
          %1805 = vmatprep.subr.mxu0 %v1649
          %1806 = vmatpush1.msra.mxu0 %v1647
          %1807 = vmatprep.subr.mxu0 0.0
          %1808 = vmatpush1.msra.mxu0 0.0
          %1809 = vmatprep.subr.mxu0 0.0
          %1810 = vmatpush1.msra.mxu0 0.0
          %1811 = vmatprep.subr.mxu0 0.0
          %1812 = vmatpush1.msra.mxu0 0.0
          %1813 = vmatprep.subr.mxu0 0.0
          %1814 = vmatpush1.msra.mxu0 0.0
          %1815 = vmatprep.subr.mxu0 0.0
          %1816 = vmatpush1.msra.mxu0 0.0
          %1817 = vmatprep.subr.mxu0 0.0
          %1818 = vmatpush1.msra.mxu0 0.0
          %1819 = vmatprep.subr.mxu0 0.0
          %1820 = vmatpush1.msra.mxu0 0.0
          %1821 = vmatprep.subr.mxu0 0.0
          %1822 = vmatpush1.msra.mxu0 0.0
          %1823 = vmatprep.subr.mxu0 0.0
          %1824 = vmatpush1.msra.mxu0 0.0
          %1825 = vmatprep.subr.mxu0 0.0
          %1826 = vmatpush1.msra.mxu0 0.0
          %1827 = vmatprep.subr.mxu0 0.0
          %1828 = vmatpush1.msra.mxu0 0.0
          %1829 = vmatprep.subr.mxu0 0.0
          %1830 = vmatpush1.msra.mxu0 0.0
          %1831 = vmatprep.subr.mxu0 0.0
          %1832 = vmatpush1.msra.mxu0 0.0
          %1833 = vmatprep.subr.mxu0 0.0
          %1834 = vmatpush1.msra.mxu0 0.0
          %1835 = vmatprep.subr.mxu0 0.0
          %1836 = vmatpush1.msra.mxu0 0.0
          %1837 = vmatprep.subr.mxu0 0.0
          %1838 = vmatpush1.msra.mxu0 0.0
          %1839 = vmatprep.subr.mxu0 0.0
          %1840 = vmatpush1.msra.mxu0 0.0
          %1841 = vmatprep.subr.mxu0 0.0
          %1842 = vmatpush1.msra.mxu0 0.0
          %1843 = vmatprep.subr.mxu0 0.0
          %1844 = vmatpush1.msra.mxu0 0.0
          %1845 = vmatprep.subr.mxu0 0.0
          %1846 = vmatpush1.msra.mxu0 0.0
          %1847 = vmatprep.subr.mxu0 0.0
          %1848 = vmatpush1.msra.mxu0 0.0
          %1849 = vmatprep.subr.mxu0 0.0
          %1850 = vmatpush1.msra.mxu0 0.0
          %1851 = vmatprep.subr.mxu0 0.0
          %1852 = vmatpush1.msra.mxu0 0.0
          %1853 = vmatprep.subr.mxu0 0.0
          %1854 = vmatpush1.msra.mxu0 0.0
          %1855 = vmatprep.subr.mxu0 0.0
          %1856 = vmatpush1.msra.mxu0 0.0
          %1857 = vmatprep.subr.mxu0 0.0
          %1858 = vmatpush1.msra.mxu0 0.0
          %1859 = vmatprep.subr.mxu0 0.0
          %1860 = vmatpush1.msra.mxu0 0.0
          %1861 = vmatprep.subr.mxu0 0.0
          %1862 = vmatpush1.msra.mxu0 0.0
          %1863 = vmatprep.subr.mxu0 0.0
          %1864 = vmatpush1.msra.mxu0 0.0
          %1865 = vmatprep.subr.mxu0 0.0
          %1866 = vmatpush1.msra.mxu0 0.0
          %1867 = vmatprep.subr.mxu0 0.0
          %1868 = vmatpush1.msra.mxu0 0.0
          %1869 = vmatprep.mubr.f32.mxu0 0.0
          %1870 = vmatmul.mubr.f32.gmra.mrb[0].mxu0 %v1634
          %v1871 = vpop.f32.mrb[0].mxu0
          %v1872 = vadd.f32 0.0, %v1871
          %v1873 = vpop.f32.mrb[0].mxu0
          %v1874 = vadd.f32 0.0, %v1873
          %1875 = vmatprep.mubr.f32.mxu0 0.0
          %1876 = vmatmul.mubr.f32.gmra.mrb[0].mxu0 %v1637
          %v1877 = vpop.f32.mrb[0].mxu0
          %v1878 = vadd.f32 0.0, %v1877
          %v1879 = vpop.f32.mrb[0].mxu0
          %v1880 = vadd.f32 0.0, %v1879
          %1881 = vdwg.mxu0
          %v1883 = vsel %vm1009, %v723, 0
          %v1886 = vsel %vm1009, %v728, 0
          %1888 = vmatprep.subr.mxu0 %v453
          %1889 = vmatpush1.msra.mxu0 %v452
          %1890 = vmatprep.subr.mxu0 %v457
          %1891 = vmatpush1.msra.mxu0 %v456
          %1892 = vmatprep.subr.mxu0 %v461
          %1893 = vmatpush1.msra.mxu0 %v460
          %1894 = vmatprep.subr.mxu0 %v465
          %1895 = vmatpush1.msra.mxu0 %v464
          %1896 = vmatprep.subr.mxu0 0.0
          %1897 = vmatpush1.msra.mxu0 0.0
          %1898 = vmatprep.subr.mxu0 0.0
          %1899 = vmatpush1.msra.mxu0 0.0
          %1900 = vmatprep.subr.mxu0 0.0
          %1901 = vmatpush1.msra.mxu0 0.0
          %1902 = vmatprep.subr.mxu0 0.0
          %1903 = vmatpush1.msra.mxu0 0.0
          %1904 = vmatprep.subr.mxu0 0.0
          %1905 = vmatpush1.msra.mxu0 0.0
          %1906 = vmatprep.subr.mxu0 0.0
          %1907 = vmatpush1.msra.mxu0 0.0
          %1908 = vmatprep.subr.mxu0 0.0
          %1909 = vmatpush1.msra.mxu0 0.0
          %1910 = vmatprep.subr.mxu0 0.0
          %1911 = vmatpush1.msra.mxu0 0.0
          %1912 = vmatprep.subr.mxu0 0.0
          %1913 = vmatpush1.msra.mxu0 0.0
          %1914 = vmatprep.subr.mxu0 0.0
          %1915 = vmatpush1.msra.mxu0 0.0
          %1916 = vmatprep.subr.mxu0 0.0
          %1917 = vmatpush1.msra.mxu0 0.0
          %1918 = vmatprep.subr.mxu0 0.0
          %1919 = vmatpush1.msra.mxu0 0.0
          %1920 = vmatprep.subr.mxu0 0.0
          %1921 = vmatpush1.msra.mxu0 0.0
          %1922 = vmatprep.subr.mxu0 0.0
          %1923 = vmatpush1.msra.mxu0 0.0
          %1924 = vmatprep.subr.mxu0 0.0
          %1925 = vmatpush1.msra.mxu0 0.0
          %1926 = vmatprep.subr.mxu0 0.0
          %1927 = vmatpush1.msra.mxu0 0.0
          %1928 = vmatprep.subr.mxu0 0.0
          %1929 = vmatpush1.msra.mxu0 0.0
          %1930 = vmatprep.subr.mxu0 0.0
          %1931 = vmatpush1.msra.mxu0 0.0
          %1932 = vmatprep.subr.mxu0 0.0
          %1933 = vmatpush1.msra.mxu0 0.0
          %1934 = vmatprep.subr.mxu0 0.0
          %1935 = vmatpush1.msra.mxu0 0.0
          %1936 = vmatprep.subr.mxu0 0.0
          %1937 = vmatpush1.msra.mxu0 0.0
          %1938 = vmatprep.subr.mxu0 0.0
          %1939 = vmatpush1.msra.mxu0 0.0
          %1940 = vmatprep.subr.mxu0 0.0
          %1941 = vmatpush1.msra.mxu0 0.0
          %1942 = vmatprep.subr.mxu0 0.0
          %1943 = vmatpush1.msra.mxu0 0.0
          %1944 = vmatprep.subr.mxu0 0.0
          %1945 = vmatpush1.msra.mxu0 0.0
          %1946 = vmatprep.subr.mxu0 0.0
          %1947 = vmatpush1.msra.mxu0 0.0
          %1948 = vmatprep.subr.mxu0 0.0
          %1949 = vmatpush1.msra.mxu0 0.0
          %1950 = vmatprep.subr.mxu0 0.0
          %1951 = vmatpush1.msra.mxu0 0.0
          %1952 = vmatprep.mubr.f32.mxu0 0.0
          %1953 = vmatmul.mubr.f32.gmra.mrb[0].mxu0 %v1883
          %v1954 = vpop.f32.mrb[0].mxu0
          %v1955 = vadd.f32 0.0, %v1954
          %v1956 = vpop.f32.mrb[0].mxu0
          %v1957 = vadd.f32 0.0, %v1956
          %1958 = vmatprep.mubr.f32.mxu0 0.0
          %1959 = vmatmul.mubr.f32.gmra.mrb[0].mxu0 %v1886
          %v1960 = vpop.f32.mrb[0].mxu0
          %v1961 = vadd.f32 0.0, %v1960
          %v1962 = vpop.f32.mrb[0].mxu0
          %v1963 = vadd.f32 0.0, %v1962
          %1964 = vdwg.mxu0
          %1965 = vmatprep.subr.mxu0 %v455
          %1966 = vmatpush1.msra.mxu0 %v454
          %1967 = vmatprep.subr.mxu0 %v459
          %1968 = vmatpush1.msra.mxu0 %v458
          %1969 = vmatprep.subr.mxu0 %v463
          %1970 = vmatpush1.msra.mxu0 %v462
          %1971 = vmatprep.subr.mxu0 %v467
          %1972 = vmatpush1.msra.mxu0 %v466
          %1973 = vmatprep.subr.mxu0 0.0
          %1974 = vmatpush1.msra.mxu0 0.0
          %1975 = vmatprep.subr.mxu0 0.0
          %1976 = vmatpush1.msra.mxu0 0.0
          %1977 = vmatprep.subr.mxu0 0.0
          %1978 = vmatpush1.msra.mxu0 0.0
          %1979 = vmatprep.subr.mxu0 0.0
          %1980 = vmatpush1.msra.mxu0 0.0
          %1981 = vmatprep.subr.mxu0 0.0
          %1982 = vmatpush1.msra.mxu0 0.0
          %1983 = vmatprep.subr.mxu0 0.0
          %1984 = vmatpush1.msra.mxu0 0.0
          %1985 = vmatprep.subr.mxu0 0.0
          %1986 = vmatpush1.msra.mxu0 0.0
          %1987 = vmatprep.subr.mxu0 0.0
          %1988 = vmatpush1.msra.mxu0 0.0
          %1989 = vmatprep.subr.mxu0 0.0
          %1990 = vmatpush1.msra.mxu0 0.0
          %1991 = vmatprep.subr.mxu0 0.0
          %1992 = vmatpush1.msra.mxu0 0.0
          %1993 = vmatprep.subr.mxu0 0.0
          %1994 = vmatpush1.msra.mxu0 0.0
          %1995 = vmatprep.subr.mxu0 0.0
          %1996 = vmatpush1.msra.mxu0 0.0
          %1997 = vmatprep.subr.mxu0 0.0
          %1998 = vmatpush1.msra.mxu0 0.0
          %1999 = vmatprep.subr.mxu0 0.0
          %2000 = vmatpush1.msra.mxu0 0.0
          %2001 = vmatprep.subr.mxu0 0.0
          %2002 = vmatpush1.msra.mxu0 0.0
          %2003 = vmatprep.subr.mxu0 0.0
          %2004 = vmatpush1.msra.mxu0 0.0
          %2005 = vmatprep.subr.mxu0 0.0
          %2006 = vmatpush1.msra.mxu0 0.0
          %2007 = vmatprep.subr.mxu0 0.0
          %2008 = vmatpush1.msra.mxu0 0.0
          %2009 = vmatprep.subr.mxu0 0.0
          %2010 = vmatpush1.msra.mxu0 0.0
          %2011 = vmatprep.subr.mxu0 0.0
          %2012 = vmatpush1.msra.mxu0 0.0
          %2013 = vmatprep.subr.mxu0 0.0
          %2014 = vmatpush1.msra.mxu0 0.0
          %2015 = vmatprep.subr.mxu0 0.0
          %2016 = vmatpush1.msra.mxu0 0.0
          %2017 = vmatprep.subr.mxu0 0.0
          %2018 = vmatpush1.msra.mxu0 0.0
          %2019 = vmatprep.subr.mxu0 0.0
          %2020 = vmatpush1.msra.mxu0 0.0
          %2021 = vmatprep.subr.mxu0 0.0
          %2022 = vmatpush1.msra.mxu0 0.0
          %2023 = vmatprep.subr.mxu0 0.0
          %2024 = vmatpush1.msra.mxu0 0.0
          %2025 = vmatprep.subr.mxu0 0.0
          %2026 = vmatpush1.msra.mxu0 0.0
          %2027 = vmatprep.subr.mxu0 0.0
          %2028 = vmatpush1.msra.mxu0 0.0
          %2029 = vmatprep.mubr.f32.mxu0 0.0
          %2030 = vmatmul.mubr.f32.gmra.mrb[0].mxu0 %v1883
          %v2031 = vpop.f32.mrb[0].mxu0
          %v2032 = vadd.f32 0.0, %v2031
          %v2033 = vpop.f32.mrb[0].mxu0
          %v2034 = vadd.f32 0.0, %v2033
          %2035 = vmatprep.mubr.f32.mxu0 0.0
          %2036 = vmatmul.mubr.f32.gmra.mrb[0].mxu0 %v1886
          %v2037 = vpop.f32.mrb[0].mxu0
          %v2038 = vadd.f32 0.0, %v2037
          %v2039 = vpop.f32.mrb[0].mxu0
          %v2040 = vadd.f32 0.0, %v2039
          %2041 = vdwg.mxu0
          %v2042 = vadd.f32 %v1282, %v1718
          %v2043 = vadd.f32 %v1284, %v1720
          %v2044 = vadd.f32 %v1359, %v1795
          %v2045 = vadd.f32 %v1361, %v1797
          %v2046 = vadd.f32 %v1436, %v1872
          %v2047 = vadd.f32 %v1438, %v1874
          %v2048 = vadd.f32 %v1288, %v1724
          %v2049 = vadd.f32 %v1290, %v1726
          %v2050 = vadd.f32 %v1365, %v1801
          %v2051 = vadd.f32 %v1367, %v1803
          %v2052 = vadd.f32 %v1442, %v1878
          %v2053 = vadd.f32 %v1444, %v1880
          %v2054 = vadd.f32 %v1519, %v1955
          %v2055 = vadd.f32 %v1521, %v1957
          %v2056 = vadd.f32 %v1596, %v2032
          %v2057 = vadd.f32 %v1598, %v2034
          %v2058 = vadd.f32 %v1525, %v1961
          %v2059 = vadd.f32 %v1527, %v1963
          %v2060 = vadd.f32 %v1602, %v2038
          %v2061 = vadd.f32 %v1604, %v2040
          %v2062 = vadd.f32 %v2042, %v2054
          %v2063 = vadd.f32 %v2043, %v2055
          %v2064 = vadd.f32 %v2044, %v2056
          %v2065 = vadd.f32 %v2045, %v2057
          %v2066 = vadd.f32 %v2048, %v2058
          %v2067 = vadd.f32 %v2049, %v2059
          %v2068 = vadd.f32 %v2050, %v2060
          %v2069 = vadd.f32 %v2051, %v2061
          %v2070 = vmul.f32 %v492, %v2062
          %v2071 = vmul.f32 %v493, %v2063
          %v2072 = vmul.f32 %v494, %v2064
          %v2073 = vmul.f32 %v495, %v2065
          %v2074 = vmul.f32 %v496, %v2066
          %v2075 = vmul.f32 %v497, %v2067
          %v2076 = vmul.f32 %v498, %v2068
          %v2077 = vmul.f32 %v499, %v2069
          %2080 = vrot.lane.b32.xlu0 %v2070, 64
          %v2081 = vpop.permute.xlu0 %2080
          %2082 = vrot.lane.b32.xlu0 %v2074, 64
          %v2083 = vpop.permute.xlu0 %2082
          %v2086 = vadd.f32 %v2070, %v2081
          %v2087 = vadd.f32 %v2074, %v2083
          %v2088 = vadd.f32 %v2086, %v2071
          %v2089 = vadd.f32 %v2087, %v2075
          %2092 = vrot.lane.b32.xlu0 %v2071, 64
          %v2093 = vpop.permute.xlu0 %2092
          %2094 = vrot.lane.b32.xlu0 %v2075, 64
          %v2095 = vpop.permute.xlu0 %2094
          %v2098 = vadd.f32 %v2088, %v2093
          %v2099 = vadd.f32 %v2089, %v2095
          %v2100 = vadd.f32 %v2098, %v2072
          %v2101 = vadd.f32 %v2099, %v2076
          %2104 = vrot.lane.b32.xlu0 %v2072, 64
          %v2105 = vpop.permute.xlu0 %2104
          %2106 = vrot.lane.b32.xlu0 %v2076, 64
          %v2107 = vpop.permute.xlu0 %2106
          %v2110 = vadd.f32 %v2100, %v2105
          %v2111 = vadd.f32 %v2101, %v2107
          %v2112 = vadd.f32 %v2110, %v2073
          %v2113 = vadd.f32 %v2111, %v2077
          %2116 = vrot.lane.b32.xlu0 %v2073, 64
          %v2117 = vpop.permute.xlu0 %2116
          %2118 = vrot.lane.b32.xlu0 %v2077, 64
          %v2119 = vpop.permute.xlu0 %2118
          %v2122 = vadd.f32 %v2112, %v2117
          %v2123 = vadd.f32 %v2113, %v2119
          %v2124 = vadd.f32 %v504, %v2122
          %v2125 = vadd.f32 %v505, %v2123
          %v2126 = vxor.u32 %v2124, 2147483648
          %v2127 = vxor.u32 %v2125, 2147483648
          %v2128 = vmul.f32 %v2126, 1.442695
          %v2129 = vpow.pop %v2128
          %v2130 = vmul.f32 %v2127, 1.442695
          %v2131 = vpow.pop %v2130
          %v2132 = vadd.f32 %v2129, 1.0
          %v2133 = vadd.f32 %v2131, 1.0
          %v2134 = vrcp.pop %v2132
          %v2135 = vmul.f32 1.0, %v2134
          %v2136 = vrcp.pop %v2133
          %v2137 = vmul.f32 1.0, %v2136
          %2140 = vrot.lane.b32.xlu0 %v516, 32
          %v2141 = vpop.permute.xlu0 %2140
          %2142 = vrot.lane.b32.xlu0 %v517, 32
          %v2143 = vpop.permute.xlu0 %2142
          %v2146 = vmul.f32 %v2135, %v2141
          %v2147 = vmul.f32 %v2137, %v2143
          %2150 = vrot.lane.b32.xlu0 %v2146, 96
          %v2151 = vpop.permute.xlu0 %2150
          %2152 = vrot.lane.b32.xlu0 %v2147, 96
          %v2153 = vpop.permute.xlu0 %2152
          %2156 = vmatprep.subr.mxu0 0.0
          %2157 = vmatpush1.msra.mxu0 %v2151
          %2158 = vmatprep.subr.mxu0 0.0
          %2159 = vmatpush1.msra.mxu0 %v2153
          %2160 = vmatprep.subr.mxu0 0.0
          %2161 = vmatpush1.msra.mxu0 0.0
          %2162 = vmatprep.subr.mxu0 0.0
          %2163 = vmatpush1.msra.mxu0 0.0
          %2164 = vmatprep.subr.mxu0 0.0
          %2165 = vmatpush1.msra.mxu0 0.0
          %2166 = vmatprep.subr.mxu0 0.0
          %2167 = vmatpush1.msra.mxu0 0.0
          %2168 = vmatprep.subr.mxu0 0.0
          %2169 = vmatpush1.msra.mxu0 0.0
          %2170 = vmatprep.subr.mxu0 0.0
          %2171 = vmatpush1.msra.mxu0 0.0
          %2172 = vmatprep.subr.mxu0 0.0
          %2173 = vmatpush1.msra.mxu0 0.0
          %2174 = vmatprep.subr.mxu0 0.0
          %2175 = vmatpush1.msra.mxu0 0.0
          %2176 = vmatprep.subr.mxu0 0.0
          %2177 = vmatpush1.msra.mxu0 0.0
          %2178 = vmatprep.subr.mxu0 0.0
          %2179 = vmatpush1.msra.mxu0 0.0
          %2180 = vmatprep.subr.mxu0 0.0
          %2181 = vmatpush1.msra.mxu0 0.0
          %2182 = vmatprep.subr.mxu0 0.0
          %2183 = vmatpush1.msra.mxu0 0.0
          %2184 = vmatprep.subr.mxu0 0.0
          %2185 = vmatpush1.msra.mxu0 0.0
          %2186 = vmatprep.subr.mxu0 0.0
          %2187 = vmatpush1.msra.mxu0 0.0
          %2188 = vmatprep.subr.mxu0 0.0
          %2189 = vmatpush1.msra.mxu0 0.0
          %2190 = vmatprep.subr.mxu0 0.0
          %2191 = vmatpush1.msra.mxu0 0.0
          %2192 = vmatprep.subr.mxu0 0.0
          %2193 = vmatpush1.msra.mxu0 0.0
          %2194 = vmatprep.subr.mxu0 0.0
          %2195 = vmatpush1.msra.mxu0 0.0
          %2196 = vmatprep.subr.mxu0 0.0
          %2197 = vmatpush1.msra.mxu0 0.0
          %2198 = vmatprep.subr.mxu0 0.0
          %2199 = vmatpush1.msra.mxu0 0.0
          %2200 = vmatprep.subr.mxu0 0.0
          %2201 = vmatpush1.msra.mxu0 0.0
          %2202 = vmatprep.subr.mxu0 0.0
          %2203 = vmatpush1.msra.mxu0 0.0
          %2204 = vmatprep.subr.mxu0 0.0
          %2205 = vmatpush1.msra.mxu0 0.0
          %2206 = vmatprep.subr.mxu0 0.0
          %2207 = vmatpush1.msra.mxu0 0.0
          %2208 = vmatprep.subr.mxu0 0.0
          %2209 = vmatpush1.msra.mxu0 0.0
          %2210 = vmatprep.subr.mxu0 0.0
          %2211 = vmatpush1.msra.mxu0 0.0
          %2212 = vmatprep.subr.mxu0 0.0
          %2213 = vmatpush1.msra.mxu0 0.0
          %2214 = vmatprep.subr.mxu0 0.0
          %2215 = vmatpush1.msra.mxu0 0.0
          %2216 = vmatprep.subr.mxu0 0.0
          %2217 = vmatpush1.msra.mxu0 0.0
          %2218 = vmatprep.subr.mxu0 0.0
          %2219 = vmatpush1.msra.mxu0 0.0
          %2220 = vmatprep.mubr.f32.mxu0 0.0
          %2221 = vmatmul.mubr.f32.gmra.mrb[0].mxu0 %v524
          %v2222 = vpop.f32.mrb[0].mxu0
          %v2223 = vadd.f32 0.0, %v2222
          %v2224 = vpop.f32.mrb[0].mxu0
          %2225 = vmatprep.mubr.f32.mxu0 0.0
          %2226 = vmatmul.mubr.f32.gmra.mrb[0].mxu0 %v527
          %v2227 = vpop.f32.mrb[0].mxu0
          %v2228 = vadd.f32 0.0, %v2227
          %v2229 = vpop.f32.mrb[0].mxu0
          %2230 = vmatprep.mubr.f32.mxu0 0.0
          %2231 = vmatmul.mubr.f32.gmra.mrb[0].mxu0 %v530
          %v2232 = vpop.f32.mrb[0].mxu0
          %v2233 = vadd.f32 0.0, %v2232
          %v2234 = vpop.f32.mrb[0].mxu0
          %2235 = vmatprep.mubr.f32.mxu0 0.0
          %2236 = vmatmul.mubr.f32.gmra.mrb[0].mxu0 %v533
          %v2237 = vpop.f32.mrb[0].mxu0
          %v2238 = vadd.f32 0.0, %v2237
          %v2239 = vpop.f32.mrb[0].mxu0
          %2240 = vmatprep.mubr.f32.mxu0 0.0
          %2241 = vmatmul.mubr.f32.gmra.mrb[0].mxu0 %v536
          %v2242 = vpop.f32.mrb[0].mxu0
          %v2243 = vadd.f32 0.0, %v2242
          %v2244 = vpop.f32.mrb[0].mxu0
          %2245 = vmatprep.mubr.f32.mxu0 0.0
          %2246 = vmatmul.mubr.f32.gmra.mrb[0].mxu0 %v539
          %v2247 = vpop.f32.mrb[0].mxu0
          %v2248 = vadd.f32 0.0, %v2247
          %v2249 = vpop.f32.mrb[0].mxu0
          %2250 = vdwg.mxu0
          %v2252 = vsel %vm1009, %v2223, 0
          %v2255 = vsel %vm1009, %v2228, 0
          %2257 = vmatprep.subr.mxu0 %v469
          %2258 = vmatpush1.msra.mxu0 %v468
          %2259 = vmatprep.subr.mxu0 %v471
          %2260 = vmatpush1.msra.mxu0 %v470
          %2261 = vmatprep.subr.mxu0 %v473
          %2262 = vmatpush1.msra.mxu0 %v472
          %2263 = vmatprep.subr.mxu0 %v475
          %2264 = vmatpush1.msra.mxu0 %v474
          %2265 = vmatprep.subr.mxu0 0.0
          %2266 = vmatpush1.msra.mxu0 0.0
          %2267 = vmatprep.subr.mxu0 0.0
          %2268 = vmatpush1.msra.mxu0 0.0
          %2269 = vmatprep.subr.mxu0 0.0
          %2270 = vmatpush1.msra.mxu0 0.0
          %2271 = vmatprep.subr.mxu0 0.0
          %2272 = vmatpush1.msra.mxu0 0.0
          %2273 = vmatprep.subr.mxu0 0.0
          %2274 = vmatpush1.msra.mxu0 0.0
          %2275 = vmatprep.subr.mxu0 0.0
          %2276 = vmatpush1.msra.mxu0 0.0
          %2277 = vmatprep.subr.mxu0 0.0
          %2278 = vmatpush1.msra.mxu0 0.0
          %2279 = vmatprep.subr.mxu0 0.0
          %2280 = vmatpush1.msra.mxu0 0.0
          %2281 = vmatprep.subr.mxu0 0.0
          %2282 = vmatpush1.msra.mxu0 0.0
          %2283 = vmatprep.subr.mxu0 0.0
          %2284 = vmatpush1.msra.mxu0 0.0
          %2285 = vmatprep.subr.mxu0 0.0
          %2286 = vmatpush1.msra.mxu0 0.0
          %2287 = vmatprep.subr.mxu0 0.0
          %2288 = vmatpush1.msra.mxu0 0.0
          %2289 = vmatprep.subr.mxu0 0.0
          %2290 = vmatpush1.msra.mxu0 0.0
          %2291 = vmatprep.subr.mxu0 0.0
          %2292 = vmatpush1.msra.mxu0 0.0
          %2293 = vmatprep.subr.mxu0 0.0
          %2294 = vmatpush1.msra.mxu0 0.0
          %2295 = vmatprep.subr.mxu0 0.0
          %2296 = vmatpush1.msra.mxu0 0.0
          %2297 = vmatprep.subr.mxu0 0.0
          %2298 = vmatpush1.msra.mxu0 0.0
          %2299 = vmatprep.subr.mxu0 0.0
          %2300 = vmatpush1.msra.mxu0 0.0
          %2301 = vmatprep.subr.mxu0 0.0
          %2302 = vmatpush1.msra.mxu0 0.0
          %2303 = vmatprep.subr.mxu0 0.0
          %2304 = vmatpush1.msra.mxu0 0.0
          %2305 = vmatprep.subr.mxu0 0.0
          %2306 = vmatpush1.msra.mxu0 0.0
          %2307 = vmatprep.subr.mxu0 0.0
          %2308 = vmatpush1.msra.mxu0 0.0
          %2309 = vmatprep.subr.mxu0 0.0
          %2310 = vmatpush1.msra.mxu0 0.0
          %2311 = vmatprep.subr.mxu0 0.0
          %2312 = vmatpush1.msra.mxu0 0.0
          %2313 = vmatprep.subr.mxu0 0.0
          %2314 = vmatpush1.msra.mxu0 0.0
          %2315 = vmatprep.subr.mxu0 0.0
          %2316 = vmatpush1.msra.mxu0 0.0
          %2317 = vmatprep.subr.mxu0 0.0
          %2318 = vmatpush1.msra.mxu0 0.0
          %2319 = vmatprep.subr.mxu0 0.0
          %2320 = vmatpush1.msra.mxu0 0.0
          %2321 = vmatprep.mubr.f32.mxu0 0.0
          %2322 = vmatmul.mubr.f32.gmra.mrb[0].mxu0 %v2252
          %v2323 = vpop.f32.mrb[0].mxu0
          %v2324 = vadd.f32 0.0, %v2323
          %v2325 = vpop.f32.mrb[0].mxu0
          %v2326 = vadd.f32 0.0, %v2325
          %2327 = vmatprep.mubr.f32.mxu0 0.0
          %2328 = vmatmul.mubr.f32.gmra.mrb[0].mxu0 %v2255
          %v2329 = vpop.f32.mrb[0].mxu0
          %v2330 = vadd.f32 0.0, %v2329
          %v2331 = vpop.f32.mrb[0].mxu0
          %v2332 = vadd.f32 0.0, %v2331
          %2333 = vdwg.mxu0
          %v2334 = vadd.f32 %v2046, %v2324
          %v2335 = vadd.f32 %v2047, %v2326
          %v2336 = vadd.f32 %v2052, %v2330
          %v2337 = vadd.f32 %v2053, %v2332
          %v2339 = vsel %vm1009, %v2233, 0
          %v2342 = vsel %vm1009, %v2238, 0
          %2344 = vmatprep.subr.mxu0 %v477
          %2345 = vmatpush1.msra.mxu0 %v476
          %2346 = vmatprep.subr.mxu0 %v479
          %2347 = vmatpush1.msra.mxu0 %v478
          %2348 = vmatprep.subr.mxu0 %v481
          %2349 = vmatpush1.msra.mxu0 %v480
          %2350 = vmatprep.subr.mxu0 %v483
          %2351 = vmatpush1.msra.mxu0 %v482
          %2352 = vmatprep.subr.mxu0 0.0
          %2353 = vmatpush1.msra.mxu0 0.0
          %2354 = vmatprep.subr.mxu0 0.0
          %2355 = vmatpush1.msra.mxu0 0.0
          %2356 = vmatprep.subr.mxu0 0.0
          %2357 = vmatpush1.msra.mxu0 0.0
          %2358 = vmatprep.subr.mxu0 0.0
          %2359 = vmatpush1.msra.mxu0 0.0
          %2360 = vmatprep.subr.mxu0 0.0
          %2361 = vmatpush1.msra.mxu0 0.0
          %2362 = vmatprep.subr.mxu0 0.0
          %2363 = vmatpush1.msra.mxu0 0.0
          %2364 = vmatprep.subr.mxu0 0.0
          %2365 = vmatpush1.msra.mxu0 0.0
          %2366 = vmatprep.subr.mxu0 0.0
          %2367 = vmatpush1.msra.mxu0 0.0
          %2368 = vmatprep.subr.mxu0 0.0
          %2369 = vmatpush1.msra.mxu0 0.0
          %2370 = vmatprep.subr.mxu0 0.0
          %2371 = vmatpush1.msra.mxu0 0.0
          %2372 = vmatprep.subr.mxu0 0.0
          %2373 = vmatpush1.msra.mxu0 0.0
          %2374 = vmatprep.subr.mxu0 0.0
          %2375 = vmatpush1.msra.mxu0 0.0
          %2376 = vmatprep.subr.mxu0 0.0
          %2377 = vmatpush1.msra.mxu0 0.0
          %2378 = vmatprep.subr.mxu0 0.0
          %2379 = vmatpush1.msra.mxu0 0.0
          %2380 = vmatprep.subr.mxu0 0.0
          %2381 = vmatpush1.msra.mxu0 0.0
          %2382 = vmatprep.subr.mxu0 0.0
          %2383 = vmatpush1.msra.mxu0 0.0
          %2384 = vmatprep.subr.mxu0 0.0
          %2385 = vmatpush1.msra.mxu0 0.0
          %2386 = vmatprep.subr.mxu0 0.0
          %2387 = vmatpush1.msra.mxu0 0.0
          %2388 = vmatprep.subr.mxu0 0.0
          %2389 = vmatpush1.msra.mxu0 0.0
          %2390 = vmatprep.subr.mxu0 0.0
          %2391 = vmatpush1.msra.mxu0 0.0
          %2392 = vmatprep.subr.mxu0 0.0
          %2393 = vmatpush1.msra.mxu0 0.0
          %2394 = vmatprep.subr.mxu0 0.0
          %2395 = vmatpush1.msra.mxu0 0.0
          %2396 = vmatprep.subr.mxu0 0.0
          %2397 = vmatpush1.msra.mxu0 0.0
          %2398 = vmatprep.subr.mxu0 0.0
          %2399 = vmatpush1.msra.mxu0 0.0
          %2400 = vmatprep.subr.mxu0 0.0
          %2401 = vmatpush1.msra.mxu0 0.0
          %2402 = vmatprep.subr.mxu0 0.0
          %2403 = vmatpush1.msra.mxu0 0.0
          %2404 = vmatprep.subr.mxu0 0.0
          %2405 = vmatpush1.msra.mxu0 0.0
          %2406 = vmatprep.subr.mxu0 0.0
          %2407 = vmatpush1.msra.mxu0 0.0
          %2408 = vmatprep.mubr.f32.mxu0 0.0
          %2409 = vmatmul.mubr.f32.gmra.mrb[0].mxu0 %v2339
          %v2410 = vpop.f32.mrb[0].mxu0
          %v2411 = vadd.f32 0.0, %v2410
          %v2412 = vpop.f32.mrb[0].mxu0
          %v2413 = vadd.f32 0.0, %v2412
          %2414 = vmatprep.mubr.f32.mxu0 0.0
          %2415 = vmatmul.mubr.f32.gmra.mrb[0].mxu0 %v2342
          %v2416 = vpop.f32.mrb[0].mxu0
          %v2417 = vadd.f32 0.0, %v2416
          %v2418 = vpop.f32.mrb[0].mxu0
          %v2419 = vadd.f32 0.0, %v2418
          %2420 = vdwg.mxu0
          %v2421 = vadd.f32 %v2334, %v2411
          %v2422 = vadd.f32 %v2335, %v2413
          %v2423 = vadd.f32 %v2336, %v2417
          %v2424 = vadd.f32 %v2337, %v2419
          %v2426 = vsel %vm1009, %v2243, 0
          %v2429 = vsel %vm1009, %v2248, 0
          %2431 = vmatprep.subr.mxu0 %v485
          %2432 = vmatpush1.msra.mxu0 %v484
          %2433 = vmatprep.subr.mxu0 %v487
          %2434 = vmatpush1.msra.mxu0 %v486
          %2435 = vmatprep.subr.mxu0 %v489
          %2436 = vmatpush1.msra.mxu0 %v488
          %2437 = vmatprep.subr.mxu0 %v491
          %2438 = vmatpush1.msra.mxu0 %v490
          %2439 = vmatprep.subr.mxu0 0.0
          %2440 = vmatpush1.msra.mxu0 0.0
          %2441 = vmatprep.subr.mxu0 0.0
          %2442 = vmatpush1.msra.mxu0 0.0
          %2443 = vmatprep.subr.mxu0 0.0
          %2444 = vmatpush1.msra.mxu0 0.0
          %2445 = vmatprep.subr.mxu0 0.0
          %2446 = vmatpush1.msra.mxu0 0.0
          %2447 = vmatprep.subr.mxu0 0.0
          %2448 = vmatpush1.msra.mxu0 0.0
          %2449 = vmatprep.subr.mxu0 0.0
          %2450 = vmatpush1.msra.mxu0 0.0
          %2451 = vmatprep.subr.mxu0 0.0
          %2452 = vmatpush1.msra.mxu0 0.0
          %2453 = vmatprep.subr.mxu0 0.0
          %2454 = vmatpush1.msra.mxu0 0.0
          %2455 = vmatprep.subr.mxu0 0.0
          %2456 = vmatpush1.msra.mxu0 0.0
          %2457 = vmatprep.subr.mxu0 0.0
          %2458 = vmatpush1.msra.mxu0 0.0
          %2459 = vmatprep.subr.mxu0 0.0
          %2460 = vmatpush1.msra.mxu0 0.0
          %2461 = vmatprep.subr.mxu0 0.0
          %2462 = vmatpush1.msra.mxu0 0.0
          %2463 = vmatprep.subr.mxu0 0.0
          %2464 = vmatpush1.msra.mxu0 0.0
          %2465 = vmatprep.subr.mxu0 0.0
          %2466 = vmatpush1.msra.mxu0 0.0
          %2467 = vmatprep.subr.mxu0 0.0
          %2468 = vmatpush1.msra.mxu0 0.0
          %2469 = vmatprep.subr.mxu0 0.0
          %2470 = vmatpush1.msra.mxu0 0.0
          %2471 = vmatprep.subr.mxu0 0.0
          %2472 = vmatpush1.msra.mxu0 0.0
          %2473 = vmatprep.subr.mxu0 0.0
          %2474 = vmatpush1.msra.mxu0 0.0
          %2475 = vmatprep.subr.mxu0 0.0
          %2476 = vmatpush1.msra.mxu0 0.0
          %2477 = vmatprep.subr.mxu0 0.0
          %2478 = vmatpush1.msra.mxu0 0.0
          %2479 = vmatprep.subr.mxu0 0.0
          %2480 = vmatpush1.msra.mxu0 0.0
          %2481 = vmatprep.subr.mxu0 0.0
          %2482 = vmatpush1.msra.mxu0 0.0
          %2483 = vmatprep.subr.mxu0 0.0
          %2484 = vmatpush1.msra.mxu0 0.0
          %2485 = vmatprep.subr.mxu0 0.0
          %2486 = vmatpush1.msra.mxu0 0.0
          %2487 = vmatprep.subr.mxu0 0.0
          %2488 = vmatpush1.msra.mxu0 0.0
          %2489 = vmatprep.subr.mxu0 0.0
          %2490 = vmatpush1.msra.mxu0 0.0
          %2491 = vmatprep.subr.mxu0 0.0
          %2492 = vmatpush1.msra.mxu0 0.0
          %2493 = vmatprep.subr.mxu0 0.0
          %2494 = vmatpush1.msra.mxu0 0.0
          %2495 = vmatprep.mubr.f32.mxu0 0.0
          %2496 = vmatmul.mubr.f32.gmra.mrb[0].mxu0 %v2426
          %v2497 = vpop.f32.mrb[0].mxu0
          %v2498 = vadd.f32 0.0, %v2497
          %v2499 = vpop.f32.mrb[0].mxu0
          %v2500 = vadd.f32 0.0, %v2499
          %2501 = vmatprep.mubr.f32.mxu0 0.0
          %2502 = vmatmul.mubr.f32.gmra.mrb[0].mxu0 %v2429
          %v2503 = vpop.f32.mrb[0].mxu0
          %v2504 = vadd.f32 0.0, %v2503
          %v2505 = vpop.f32.mrb[0].mxu0
          %v2506 = vadd.f32 0.0, %v2505
          %2507 = vdwg.mxu0
          %v2508 = vadd.f32 %v2421, %v2498
          %v2509 = vadd.f32 %v2422, %v2500
          %v2510 = vadd.f32 %v2423, %v2504
          %v2511 = vadd.f32 %v2424, %v2506
          %v2512 = vmul.f32 %v500, %v2508
          %v2513 = vmul.f32 %v501, %v2509
          %v2514 = vmul.f32 %v502, %v2510
          %v2515 = vmul.f32 %v503, %v2511
          %2518 = vrot.lane.b32.xlu0 %v2512, 96
          %v2519 = vpop.permute.xlu0 %2518
          %2520 = vrot.lane.b32.xlu0 %v2514, 96
          %v2521 = vpop.permute.xlu0 %2520
          %v2524 = vadd.f32 %v2512, %v2519
          %v2525 = vadd.f32 %v2514, %v2521
          %2526 = vrot.lane.b32.xlu0 %v2512, 64
          %v2527 = vpop.permute.xlu0 %2526
          %2528 = vrot.lane.b32.xlu0 %v2514, 64
          %v2529 = vpop.permute.xlu0 %2528
          %v2532 = vadd.f32 %v2524, %v2527
          %v2533 = vadd.f32 %v2525, %v2529
          %2534 = vrot.lane.b32.xlu0 %v2512, 32
          %v2535 = vpop.permute.xlu0 %2534
          %2536 = vrot.lane.b32.xlu0 %v2514, 32
          %v2537 = vpop.permute.xlu0 %2536
          %v2540 = vadd.f32 %v2532, %v2535
          %v2541 = vadd.f32 %v2533, %v2537
          %v2542 = vadd.f32 %v2540, %v2513
          %v2543 = vadd.f32 %v2541, %v2515
          %2546 = vrot.lane.b32.xlu0 %v2513, 96
          %v2547 = vpop.permute.xlu0 %2546
          %2548 = vrot.lane.b32.xlu0 %v2515, 96
          %v2549 = vpop.permute.xlu0 %2548
          %v2552 = vadd.f32 %v2542, %v2547
          %v2553 = vadd.f32 %v2543, %v2549
          %2554 = vrot.lane.b32.xlu0 %v2513, 64
          %v2555 = vpop.permute.xlu0 %2554
          %2556 = vrot.lane.b32.xlu0 %v2515, 64
          %v2557 = vpop.permute.xlu0 %2556
          %v2560 = vadd.f32 %v2552, %v2555
          %v2561 = vadd.f32 %v2553, %v2557
          %2562 = vrot.lane.b32.xlu0 %v2513, 32
          %v2563 = vpop.permute.xlu0 %2562
          %2564 = vrot.lane.b32.xlu0 %v2515, 32
          %v2565 = vpop.permute.xlu0 %2564
          %v2568 = vadd.f32 %v2560, %v2563
          %v2569 = vadd.f32 %v2561, %v2565
          %v2570 = vadd.f32 %v506, %v2568
          %v2571 = vadd.f32 %v507, %v2569
          %v2572 = vtanh.pop %v2570
          %v2573 = vtanh.pop %v2571
          %v2574 = vmul.f32 %v2135, %v516
          %v2575 = vmul.f32 %v2137, %v517
          %v2576 = vsub.f32 1.0, %v2135
          %v2577 = vsub.f32 1.0, %v2137
          %v2578 = vmul.f32 %v2576, %v2572
          %v2579 = vmul.f32 %v2577, %v2573
          %v2580 = vadd.f32 %v2574, %v2578
          %v2581 = vadd.f32 %v2575, %v2579
          %s2582 = scalar_lea.vmem %s397, %s518 [#allocation7]
          %2583 = vst.msk [vmem:[%s2582] sm:$0xff] %vm1009, %v2580
          %2584 = vst.msk [vmem:[%s2582 + $0x8] sm:$0xff] %vm1009, %v2581
        $region73: #{tpu_custom_call.1} parent=59 // loop_footer
          %s515 = sadd.s32 1, %s511
        $region74: #{tpu_custom_call.1} parent=59 // loop_footer_branch
          %510 = sbr.rel target = $region70
        $region75: #{tpu_custom_call.1} parent=59 // loop_exit
          _
        %s2585 = sand.u32 %s254, 1
        %s2586 = scalar_lea.sflag [#allocation4], %s2585
        %s2587 = sand.u32 %s254, 1
        %s2588 = smul.addr %s2587, 128
        %s2589 = scalar_lea.vmem [#allocation7], %s2588
        // Predicated region
        $region76: #{tpu_custom_call.1} parent=59 // pred_check
          %p2590 = pneg %p264
        $region77: #{tpu_custom_call.1} parent=59 // pred_check_branch
          %2592 = sbr.rel (%p2590) target = $region79
        $region78: #{tpu_custom_call.1} parent=59 // pred_region
          %s2594 = ssub.s32 2048, 2048
          %2595 = vsyncadd %s2586, %s2594
          %s2596 = smul.addr %s26, 16
          %s2597 = smul.addr %s2596, 128
          %s2598 = scalar_lea.hbm %s10, %s2597
          %s2599 = sshll.u32 %s2589, 4
          %s2600 = int_to_ptr.vmem [resolvable:$true] %s2599
          %2605 = dma.vmem_to_hbm [thread:$0]  %s2600, 2048, %s2598, %s2586, 128, 128, 8
        $region79: #{tpu_custom_call.1} parent=59 // pred_fallthru
          _
      $region60: #{tpu_custom_call.1} parent=5 // pred_fallthru
        _
      %p2606 = scmp.le.s32.totalorder 2, %s21
      // Predicated region
      $region80: #{tpu_custom_call.1} parent=5 // pred_check
        %p2607 = pneg %p2606
      $region81: #{tpu_custom_call.1} parent=5 // pred_check_branch
        %2609 = sbr.rel (%p2607) target = $region83
      $region82: #{tpu_custom_call.1} parent=5 // pred_region
        %s2610 = ssub.s32 %s21, 2
        // Predicated region
        $region84: #{tpu_custom_call.1} parent=82 // pred_check
          %p2611 = pneg %p270
        $region85: #{tpu_custom_call.1} parent=82 // pred_check_branch
          %2613 = sbr.rel (%p2611) target = $region87
        $region86: #{tpu_custom_call.1} parent=82 // pred_region
          %s2614 = sand.u32 %s255, 1
          %s2615 = scalar_lea.sflag [#allocation4], %s2614
          %s2616 = sand.u32 %s255, 1
          %s2617 = smul.addr %s2616, 128
          %s2618 = scalar_lea.vmem [#allocation7], %s2617
          %2619 = dma.done %s2615, 2048
        $region87: #{tpu_custom_call.1} parent=82 // pred_fallthru
          _
      $region83: #{tpu_custom_call.1} parent=5 // pred_fallthru
        _
    $region6: #{tpu_custom_call.1} parent=1 // loop_footer
      %s25 = sadd.s32 1, %s21
    $region7: #{tpu_custom_call.1} parent=1 // loop_footer_branch
      %20 = sbr.rel target = $region3
    $region8: #{tpu_custom_call.1} parent=1 // loop_exit
      _
    %2620 = vsyncpa [#allocation3], 1
    %s2621 = scalar_lea.sflag [#allocation3], 1
    %2622 = vsyncpa %s2621, 1
    %2623 = vsyncpa [#allocation6], 1
    %2624 = vsyncpa [#allocation4], 1
    %s2625 = scalar_lea.sflag [#allocation4], 1
    %2626 = vsyncpa %s2625, 1

</llo_original>
